<compile_context>
chip_gen: v7x
topology: tpu7x:2x2x1
jax: 0.10.0
libtpu: 0.0.40
codegen_flags: <defaults>
</compile_context>

<pallas_src>
import jax
import jax.numpy as jnp
from jax import lax
from jax.experimental import pallas as pl
from jax.experimental.pallas import tpu as pltpu


# ---------------------------------------------------------------------------
# Per-generation configuration
# ---------------------------------------------------------------------------
def _tpu_generation():
    try:
        kind = jax.devices()[0].device_kind.lower()
    except Exception:
        return "unknown"
    if "v7" in kind or "7x" in kind:
        return "v7x"
    if "v6" in kind:
        return "v6e"
    if "v5p" in kind:
        return "v5p"
    if "v5" in kind:
        return "v5e"
    return "unknown"


def _auto_config(gen=None):
    """(compute_dtype, vmem_limit_bytes, min_parallel_grid_steps) per chip."""
    if gen is None:
        gen = _tpu_generation()
    if gen == "v7x":
        # bf16 VPU, only 64 MiB physical VMEM, 2 TensorCores per chip.
        return jnp.bfloat16, 48 * 1024 * 1024, 2
    if gen == "v6e":
        # bf16 VPU, 128 MiB physical VMEM, 1 TensorCore.
        return jnp.bfloat16, 80 * 1024 * 1024, 1
    if gen in ("v5e", "v5p"):
        # No bf16 VPU/EUP: keep f32 elementwise math, lean on the big VMEM.
        return jnp.float32, 96 * 1024 * 1024, 1
    return jnp.float32, 32 * 1024 * 1024, 1


def _choose_imgs_per_step(n, c, hw, in_bytes, cd_bytes, vmem_limit,
                          min_grid_steps, max_unroll=8):
    """Largest divisor of n that fits the VMEM budget and keeps grid >= min."""
    # Per-image footprint: double-buffered in/out blocks + live intermediates
    # (x, x1, x2, x3, cat in compute dtype; gate / f32 accumulators).
    per_img = hw * (4 * c * in_bytes + c * (4 * cd_bytes + 8)) + 1
    cap = int(max(1, (vmem_limit // 2) // per_img))
    cap = min(cap, max_unroll, max(1, n // max(1, min_grid_steps)))
    imgs = 1
    for d in range(1, cap + 1):
        if n % d == 0:
            imgs = d
    return imgs


# ---------------------------------------------------------------------------
# Kernel
# ---------------------------------------------------------------------------
def _make_adwconv_kernel(c, h, w, imgs, compute_dtype, mm_dtype):
    hw = h * w
    c2, c4 = c // 2, c // 4

    def kernel(x_ref, masks_ref, w1_ref, b1_ref, w2_ref, b2_ref, w3_ref,
               b3_ref, wpw_ref, bpw_ref, o_ref):
        # Boundary-validity masks (compute dtype), shared by every image.
        col_lo = masks_ref[0:1, :]    # tap at w-1 exists
        col_hi = masks_ref[1:2, :]    # tap at w+1 exists
        row_lo = masks_ref[2:3, :]    # tap at h-1 exists
        row_hi = masks_ref[3:4, :]    # tap at h+1 exists

        # Hoist per-tap weight columns and biases out of the image loop so the
        # small slices/broadcast setup are emitted once per step.
        def cols(wref):
            wt = wref[...]
            return [wt[:, k:k + 1] for k in range(9)]

        w1c, w2c, w3c = cols(w1_ref), cols(w2_ref), cols(w3_ref)
        b1 = b1_ref[...]
        b2 = b2_ref[...]
        b3 = b3_ref[...]
        wpw = wpw_ref[...]
        bpw = bpw_ref[...]

        def dwconv3x3(t, wc, bt):
            """Depthwise 3x3, stride 1, zero pad 1, on a (G, H*W) flat layout."""
            g = t.shape[0]
            # Horizontally shifted copies (zeroed outside the row): XLU rolls.
            t_m1 = pltpu.roll(t, shift=1, axis=1) * col_lo        # x[h, w-1]
            t_p1 = pltpu.roll(t, shift=hw - 1, axis=1) * col_hi   # x[h, w+1]
            th = (t_m1, t, t_p1)
            # f32 accumulator; per-channel bias folded into the init.
            acc = jnp.broadcast_to(bt, (g, hw))
            for dy in (-1, 0, 1):
                k0 = (dy + 1) * 3
                # Horizontal filtering with this kernel-row's weights
                # (compute dtype; adds into the f32 accumulator).
                s = wc[k0] * th[0] + wc[k0 + 1] * th[1] + wc[k0 + 2] * th[2]
                if dy == 0:
                    acc = acc + s
                elif dy == -1:
                    acc = acc + pltpu.roll(s, shift=w, axis=1) * row_lo
                else:
                    acc = acc + pltpu.roll(s, shift=hw - w, axis=1) * row_hi
            return acc.astype(compute_dtype)

        # Static unroll over the images packed into this grid step (imgs is a
        # small Python int picked by the wrapper).
        for gi in range(imgs):
            x = x_ref[gi].astype(compute_dtype)                   # (C, HW)

            # Depthwise chain with channel splits (torch.split semantics).
            x1 = dwconv3x3(x, w1c, b1)                            # (C,   HW)
            x2 = dwconv3x3(x1[:c2], w2c, b2)                      # (C/2, HW)
            x3 = dwconv3x3(x2[:c4], w3c, b3)                      # (C/4, HW)

            # 1x1 pointwise conv + sigmoid gate: bf16 MXU matmul, f32 accum.
            gate = jnp.dot(wpw, x.astype(mm_dtype),
                           preferred_element_type=jnp.float32)
            gate = jax.nn.sigmoid(gate + bpw)                     # (C, HW) f32

            # Gated concat assembled in registers; one full-extent (unmasked)
            # store per image instead of three sub-sublane partial stores.
            cat = jnp.concatenate([x1[c2:], x2[c4:], x3], axis=0)  # (C, HW)
            o_ref[gi] = (gate * cat.astype(jnp.float32)).astype(o_ref.dtype)

    return kernel


# ---------------------------------------------------------------------------
# Wrapper
# ---------------------------------------------------------------------------
def adwconv_pallas(x, params, *, compute_dtype=None):
    n, c, h, w = x.shape
    assert c % 4 == 0, "ADWConv requires dim divisible by 4"
    hw = h * w
    c2, c4 = c // 2, c // 4
    w1, b1, w2, b2, w3, b3, wpw, bpw = params

    gen = _tpu_generation()
    auto_cd, vmem_limit, min_grid_steps = _auto_config(gen)
    if compute_dtype is None:
        compute_dtype = auto_cd
    mm_dtype = jnp.bfloat16   # MXU-native input dtype on all generations

    # Kernel-friendly parameter forms (row-major taps: k = (dy+1)*3 + (dx+1)).
    w1k = w1.reshape(c, 9).astype(compute_dtype)
    w2k = w2.reshape(c2, 9).astype(compute_dtype)
    w3k = w3.reshape(c4, 9).astype(compute_dtype)
    wpwk = wpw.reshape(c, c).astype(mm_dtype)
    b1k = b1.reshape(c, 1).astype(jnp.float32)
    b2k = b2.reshape(c2, 1).astype(jnp.float32)
    b3k = b3.reshape(c4, 1).astype(jnp.float32)
    bpwk = bpw.reshape(c, 1).astype(jnp.float32)

    # Boundary masks for the 3x3 taps, built once host-side, stored in the
    # elementwise compute dtype (0/1 values are exact in bf16 too).
    jj = jnp.arange(hw, dtype=jnp.int32)
    colj = jj % w
    rowj = jj // w
    masks = jnp.stack([colj >= 1, colj <= w - 2,
                       rowj >= 1, rowj <= h - 2]).astype(compute_dtype)

    # Lane-dense layout: flatten (H, W) -> H*W (free, row-major contiguous).
    x_flat = x.reshape(n, c, hw)

    in_bytes = x.dtype.itemsize
    cd_bytes = jnp.dtype(compute_dtype).itemsize
    imgs = _choose_imgs_per_step(n, c, hw, in_bytes, cd_bytes, vmem_limit,
                                 min_grid_steps)
    grid = (n // imgs,)

    def bcast_spec(shape):
        nd = len(shape)
        return pl.BlockSpec(shape, lambda i, _nd=nd: (0,) * _nd)

    flops = n * hw * (20 * (c + c2 + c4)     # depthwise taps + masks (VPU)
                      + 2 * c * c            # 1x1 conv (MXU)
                      + 3 * c)               # bias add + gating mul
    transcendentals = n * c * hw             # sigmoid
    bytes_accessed = int(in_bytes * 2 * n * c * hw
                         + cd_bytes * (4 * hw + 9 * (c + c2 + c4))
                         + 2 * c * c + 4 * (2 * c + c2 + c4))

    # TODO(synk): for very large C*H*W (a single image's live intermediates
    # exceeding the scoped-VMEM budget, e.g. C=64, H=W>=192 on v7x) add a
    # spatial grid axis that tiles H into row blocks with a 3-row halo (the
    # chained 3x3 convs have a 7x7 receptive field) via manual halo DMA; at
    # current shapes whole images fit, so batching images per step is the
    # right granularity.  On v5e, if profiling ever shows exposed input DMA,
    # pipeline_mode=pl.Buffered(3) on the x BlockSpec is the next lever.
    out_flat = pl.pallas_call(
        _make_adwconv_kernel(c, h, w, imgs, compute_dtype, mm_dtype),
        out_shape=jax.ShapeDtypeStruct((n, c, hw), x.dtype),
        grid_spec=pltpu.PrefetchScalarGridSpec(
            num_scalar_prefetch=0,
            grid=grid,
            in_specs=[
                pl.BlockSpec((imgs, c, hw), lambda i: (i, 0, 0)),
                bcast_spec((4, hw)),
                bcast_spec((c, 9)), bcast_spec((c, 1)),
                bcast_spec((c2, 9)), bcast_spec((c2, 1)),
                bcast_spec((c4, 9)), bcast_spec((c4, 1)),
                bcast_spec((c, c)), bcast_spec((c, 1)),
            ],
            out_specs=pl.BlockSpec((imgs, c, hw), lambda i: (i, 0, 0)),
        ),
        compiler_params=pltpu.CompilerParams(
            dimension_semantics=("parallel",),
            vmem_limit_bytes=vmem_limit,
        ),
        cost_estimate=pl.CostEstimate(
            flops=flops,
            transcendentals=transcendentals,
            bytes_accessed=bytes_accessed,
        ),
    )(x_flat, masks, w1k, b1k, w2k, b2k, w3k, b3k, wpwk, bpwk)

    return out_flat.reshape(n, c, h, w)


# ---------------------------------------------------------------------------
# Pure-JAX reference (mirrors the PyTorch forward exactly, NCHW)
# ---------------------------------------------------------------------------
def adwconv_ref(x, params):
    w1, b1, w2, b2, w3, b3, wpw, bpw = params
    c = x.shape[1]

    def dw(t, wt, bt):
        g = t.shape[1]
        y = lax.conv_general_dilated(
            t, wt, (1, 1), ((1, 1), (1, 1)),
            dimension_numbers=('NCHW', 'OIHW', 'NCHW'), feature_group_count=g)
        return y + bt[None, :, None, None]

    x1 = dw(x, w1, b1)
    x1a, x1b = x1[:, : c // 2], x1[:, c // 2:]
    x2 = dw(x1a, w2, b2)
    x2a, x2b = x2[:, : c // 4], x2[:, c // 4:]
    x3 = dw(x2a, w3, b3)
    gate = lax.conv_general_dilated(
        x, wpw, (1, 1), 'VALID', dimension_numbers=('NCHW', 'OIHW', 'NCHW'))
    gate = jax.nn.sigmoid(gate + bpw[None, :, None, None])
    return gate * jnp.concatenate([x1b, x2b, x3], axis=1)


if __name__ == "__main__":
    N, C, H, W = 2, 8, 16, 16            # dim = C must be divisible by 4
    key = jax.random.PRNGKey(0)
    ks = jax.random.split(key, 9)
    x = jax.random.normal(ks[0], (N, C, H, W), jnp.float32)
    # deterministic synthetic parameters (shapes from ADWConv.__init__)
    w1 = 0.3 * jax.random.normal(ks[1], (C, 1, 3, 3), jnp.float32)       # dw1 w
    b1 = 0.1 * jax.random.normal(ks[2], (C,), jnp.float32)               # dw1 b
    w2 = 0.3 * jax.random.normal(ks[3], (C // 2, 1, 3, 3), jnp.float32)  # dw2 w
    b2 = 0.1 * jax.random.normal(ks[4], (C // 2,), jnp.float32)          # dw2 b
    w3 = 0.3 * jax.random.normal(ks[5], (C // 4, 1, 3, 3), jnp.float32)  # dw3 w
    b3 = 0.1 * jax.random.normal(ks[6], (C // 4,), jnp.float32)          # dw3 b
    wpw = 0.3 * jax.random.normal(ks[7], (C, C, 1, 1), jnp.float32)      # pw1 w
    bpw = 0.1 * jax.random.normal(ks[8], (C,), jnp.float32)              # pw1 b
    params = (w1, b1, w2, b2, w3, b3, wpw, bpw)

    out = adwconv_pallas(x, params)
    out = jax.block_until_ready(out)

    ref = adwconv_ref(x, params)
    assert out.shape == ref.shape == (N, C, H, W)
    max_err = float(jnp.max(jnp.abs(out - ref)))
    # Tolerance tracks the per-chip compute dtype: bf16 intermediates on
    # v6e/v7x (with f32 accumulation), f32 elsewhere; the gate matmul uses the
    # MXU-native bf16 path on all generations.
    if _auto_config(_tpu_generation())[0] == jnp.bfloat16:
        atol, rtol = 1e-1, 5e-2
    else:
        atol, rtol = 1e-2, 1e-2
    assert jnp.allclose(out, ref, atol=atol, rtol=rtol), f"max_err={max_err}"
    print("KERNEL_OK")
</pallas_src>

<mosaic_0001>
module attributes {stable_mosaic.version = 11 : i64} {
  func.func @kernel(%arg0: i32, %arg1: memref<2x8x256xf32, #tpu.memory_space<vmem>>, %arg2: memref<4x256xf32, #tpu.memory_space<vmem>>, %arg3: memref<8x9xf32, #tpu.memory_space<vmem>>, %arg4: memref<8x1xf32, #tpu.memory_space<vmem>>, %arg5: memref<4x9xf32, #tpu.memory_space<vmem>>, %arg6: memref<4x1xf32, #tpu.memory_space<vmem>>, %arg7: memref<2x9xf32, #tpu.memory_space<vmem>>, %arg8: memref<2x1xf32, #tpu.memory_space<vmem>>, %arg9: memref<8x8xbf16, #tpu.memory_space<vmem>>, %arg10: memref<8x1xf32, #tpu.memory_space<vmem>>, %arg11: memref<2x8x256xf32, #tpu.memory_space<vmem>>) attributes {dimension_semantics = [#tpu.dimension_semantics<parallel>], iteration_bounds = array<i64: 1>, scalar_prefetch = 0 : i64, scratch_operands = 0 : i64, tpu.core_type = #tpu.core_type<tc>, window_params = [{transform_indices = @transform_0, window_bounds = array<i64: 2, 8, 256>}, {pipeline_mode = #tpu.pipeline_mode<synchronous>, transform_indices = @transform_1, window_bounds = array<i64: 4, 256>}, {pipeline_mode = #tpu.pipeline_mode<synchronous>, transform_indices = @transform_2, window_bounds = array<i64: 8, 9>}, {pipeline_mode = #tpu.pipeline_mode<synchronous>, transform_indices = @transform_3, window_bounds = array<i64: 8, 1>}, {pipeline_mode = #tpu.pipeline_mode<synchronous>, transform_indices = @transform_4, window_bounds = array<i64: 4, 9>}, {pipeline_mode = #tpu.pipeline_mode<synchronous>, transform_indices = @transform_5, window_bounds = array<i64: 4, 1>}, {pipeline_mode = #tpu.pipeline_mode<synchronous>, transform_indices = @transform_6, window_bounds = array<i64: 2, 9>}, {pipeline_mode = #tpu.pipeline_mode<synchronous>, transform_indices = @transform_7, window_bounds = array<i64: 2, 1>}, {pipeline_mode = #tpu.pipeline_mode<synchronous>, transform_indices = @transform_8, window_bounds = array<i64: 8, 8>}, {pipeline_mode = #tpu.pipeline_mode<synchronous>, transform_indices = @transform_9, window_bounds = array<i64: 8, 1>}, {transform_indices = @transform_10, window_bounds = array<i64: 2, 8, 256>}]} {
    %c0 = arith.constant 0 : index
    %c0_0 = arith.constant 0 : index
    %0 = vector.load %arg2[%c0, %c0_0] : memref<4x256xf32, #tpu.memory_space<vmem>>, vector<1x256xf32>
    %c1 = arith.constant 1 : index
    %c0_1 = arith.constant 0 : index
    %1 = vector.load %arg2[%c1, %c0_1] : memref<4x256xf32, #tpu.memory_space<vmem>>, vector<1x256xf32>
    %c2 = arith.constant 2 : index
    %c0_2 = arith.constant 0 : index
    %2 = vector.load %arg2[%c2, %c0_2] : memref<4x256xf32, #tpu.memory_space<vmem>>, vector<1x256xf32>
    %c3 = arith.constant 3 : index
    %c0_3 = arith.constant 0 : index
    %3 = vector.load %arg2[%c3, %c0_3] : memref<4x256xf32, #tpu.memory_space<vmem>>, vector<1x256xf32>
    %c0_4 = arith.constant 0 : index
    %c0_5 = arith.constant 0 : index
    %4 = vector.load %arg3[%c0_4, %c0_5] : memref<8x9xf32, #tpu.memory_space<vmem>>, vector<8x9xf32>
    %5 = vector.extract_strided_slice %4 {offsets = [0, 0], sizes = [8, 1], strides = [1, 1]} : vector<8x9xf32> to vector<8x1xf32>
    %6 = vector.extract_strided_slice %4 {offsets = [0, 1], sizes = [8, 1], strides = [1, 1]} : vector<8x9xf32> to vector<8x1xf32>
    %7 = vector.extract_strided_slice %4 {offsets = [0, 2], sizes = [8, 1], strides = [1, 1]} : vector<8x9xf32> to vector<8x1xf32>
    %8 = vector.extract_strided_slice %4 {offsets = [0, 3], sizes = [8, 1], strides = [1, 1]} : vector<8x9xf32> to vector<8x1xf32>
    %9 = vector.extract_strided_slice %4 {offsets = [0, 4], sizes = [8, 1], strides = [1, 1]} : vector<8x9xf32> to vector<8x1xf32>
    %10 = vector.extract_strided_slice %4 {offsets = [0, 5], sizes = [8, 1], strides = [1, 1]} : vector<8x9xf32> to vector<8x1xf32>
    %11 = vector.extract_strided_slice %4 {offsets = [0, 6], sizes = [8, 1], strides = [1, 1]} : vector<8x9xf32> to vector<8x1xf32>
    %12 = vector.extract_strided_slice %4 {offsets = [0, 7], sizes = [8, 1], strides = [1, 1]} : vector<8x9xf32> to vector<8x1xf32>
    %13 = vector.extract_strided_slice %4 {offsets = [0, 8], sizes = [8, 1], strides = [1, 1]} : vector<8x9xf32> to vector<8x1xf32>
    %c0_6 = arith.constant 0 : index
    %c0_7 = arith.constant 0 : index
    %14 = vector.load %arg5[%c0_6, %c0_7] : memref<4x9xf32, #tpu.memory_space<vmem>>, vector<4x9xf32>
    %15 = vector.extract_strided_slice %14 {offsets = [0, 0], sizes = [4, 1], strides = [1, 1]} : vector<4x9xf32> to vector<4x1xf32>
    %16 = vector.extract_strided_slice %14 {offsets = [0, 1], sizes = [4, 1], strides = [1, 1]} : vector<4x9xf32> to vector<4x1xf32>
    %17 = vector.extract_strided_slice %14 {offsets = [0, 2], sizes = [4, 1], strides = [1, 1]} : vector<4x9xf32> to vector<4x1xf32>
    %18 = vector.extract_strided_slice %14 {offsets = [0, 3], sizes = [4, 1], strides = [1, 1]} : vector<4x9xf32> to vector<4x1xf32>
    %19 = vector.extract_strided_slice %14 {offsets = [0, 4], sizes = [4, 1], strides = [1, 1]} : vector<4x9xf32> to vector<4x1xf32>
    %20 = vector.extract_strided_slice %14 {offsets = [0, 5], sizes = [4, 1], strides = [1, 1]} : vector<4x9xf32> to vector<4x1xf32>
    %21 = vector.extract_strided_slice %14 {offsets = [0, 6], sizes = [4, 1], strides = [1, 1]} : vector<4x9xf32> to vector<4x1xf32>
    %22 = vector.extract_strided_slice %14 {offsets = [0, 7], sizes = [4, 1], strides = [1, 1]} : vector<4x9xf32> to vector<4x1xf32>
    %23 = vector.extract_strided_slice %14 {offsets = [0, 8], sizes = [4, 1], strides = [1, 1]} : vector<4x9xf32> to vector<4x1xf32>
    %c0_8 = arith.constant 0 : index
    %c0_9 = arith.constant 0 : index
    %24 = vector.load %arg7[%c0_8, %c0_9] : memref<2x9xf32, #tpu.memory_space<vmem>>, vector<2x9xf32>
    %25 = vector.extract_strided_slice %24 {offsets = [0, 0], sizes = [2, 1], strides = [1, 1]} : vector<2x9xf32> to vector<2x1xf32>
    %26 = vector.extract_strided_slice %24 {offsets = [0, 1], sizes = [2, 1], strides = [1, 1]} : vector<2x9xf32> to vector<2x1xf32>
    %27 = vector.extract_strided_slice %24 {offsets = [0, 2], sizes = [2, 1], strides = [1, 1]} : vector<2x9xf32> to vector<2x1xf32>
    %28 = vector.extract_strided_slice %24 {offsets = [0, 3], sizes = [2, 1], strides = [1, 1]} : vector<2x9xf32> to vector<2x1xf32>
    %29 = vector.extract_strided_slice %24 {offsets = [0, 4], sizes = [2, 1], strides = [1, 1]} : vector<2x9xf32> to vector<2x1xf32>
    %30 = vector.extract_strided_slice %24 {offsets = [0, 5], sizes = [2, 1], strides = [1, 1]} : vector<2x9xf32> to vector<2x1xf32>
    %31 = vector.extract_strided_slice %24 {offsets = [0, 6], sizes = [2, 1], strides = [1, 1]} : vector<2x9xf32> to vector<2x1xf32>
    %32 = vector.extract_strided_slice %24 {offsets = [0, 7], sizes = [2, 1], strides = [1, 1]} : vector<2x9xf32> to vector<2x1xf32>
    %33 = vector.extract_strided_slice %24 {offsets = [0, 8], sizes = [2, 1], strides = [1, 1]} : vector<2x9xf32> to vector<2x1xf32>
    %c0_10 = arith.constant 0 : index
    %c0_11 = arith.constant 0 : index
    %34 = vector.load %arg4[%c0_10, %c0_11] : memref<8x1xf32, #tpu.memory_space<vmem>>, vector<8x1xf32>
    %c0_12 = arith.constant 0 : index
    %c0_13 = arith.constant 0 : index
    %35 = vector.load %arg6[%c0_12, %c0_13] : memref<4x1xf32, #tpu.memory_space<vmem>>, vector<4x1xf32>
    %c0_14 = arith.constant 0 : index
    %c0_15 = arith.constant 0 : index
    %36 = vector.load %arg8[%c0_14, %c0_15] : memref<2x1xf32, #tpu.memory_space<vmem>>, vector<2x1xf32>
    %c0_16 = arith.constant 0 : index
    %c0_17 = arith.constant 0 : index
    %37 = vector.load %arg9[%c0_16, %c0_17] : memref<8x8xbf16, #tpu.memory_space<vmem>>, vector<8x8xbf16>
    %c0_18 = arith.constant 0 : index
    %c0_19 = arith.constant 0 : index
    %38 = vector.load %arg10[%c0_18, %c0_19] : memref<8x1xf32, #tpu.memory_space<vmem>>, vector<8x1xf32>
    %c0_20 = arith.constant 0 : index
    %c0_21 = arith.constant 0 : index
    %c0_22 = arith.constant 0 : index
    %39 = vector.load %arg1[%c0_20, %c0_21, %c0_22] : memref<2x8x256xf32, #tpu.memory_space<vmem>>, vector<1x8x256xf32>
    %40 = vector.shape_cast %39 : vector<1x8x256xf32> to vector<8x256xf32>
    %c1_i32 = arith.constant 1 : i32
    %41 = tpu.dynamic_rotate %40 by %c1_i32 dim 1 : vector<8x256xf32>, i32 -> vector<8x256xf32>
    %42 = vector.broadcast %0 : vector<1x256xf32> to vector<8x256xf32>
    %43 = arith.mulf %41, %42 : vector<8x256xf32>
    %c255_i32 = arith.constant 255 : i32
    %44 = tpu.dynamic_rotate %40 by %c255_i32 dim 1 : vector<8x256xf32>, i32 -> vector<8x256xf32>
    %45 = vector.broadcast %1 : vector<1x256xf32> to vector<8x256xf32>
    %46 = arith.mulf %44, %45 : vector<8x256xf32>
    %47 = vector.shape_cast %34 : vector<8x1xf32> to vector<8x1xf32>
    %48 = vector.broadcast %47 : vector<8x1xf32> to vector<8x256xf32>
    %49 = vector.broadcast %5 : vector<8x1xf32> to vector<8x256xf32>
    %50 = arith.mulf %49, %43 : vector<8x256xf32>
    %51 = vector.broadcast %6 : vector<8x1xf32> to vector<8x256xf32>
    %52 = arith.mulf %51, %40 : vector<8x256xf32>
    %53 = arith.addf %50, %52 : vector<8x256xf32>
    %54 = vector.broadcast %7 : vector<8x1xf32> to vector<8x256xf32>
    %55 = arith.mulf %54, %46 : vector<8x256xf32>
    %56 = arith.addf %53, %55 : vector<8x256xf32>
    %c16_i32 = arith.constant 16 : i32
    %57 = tpu.dynamic_rotate %56 by %c16_i32 dim 1 : vector<8x256xf32>, i32 -> vector<8x256xf32>
    %58 = vector.broadcast %2 : vector<1x256xf32> to vector<8x256xf32>
    %59 = arith.mulf %57, %58 : vector<8x256xf32>
    %60 = arith.addf %48, %59 : vector<8x256xf32>
    %61 = vector.broadcast %8 : vector<8x1xf32> to vector<8x256xf32>
    %62 = arith.mulf %61, %43 : vector<8x256xf32>
    %63 = vector.broadcast %9 : vector<8x1xf32> to vector<8x256xf32>
    %64 = arith.mulf %63, %40 : vector<8x256xf32>
    %65 = arith.addf %62, %64 : vector<8x256xf32>
    %66 = vector.broadcast %10 : vector<8x1xf32> to vector<8x256xf32>
    %67 = arith.mulf %66, %46 : vector<8x256xf32>
    %68 = arith.addf %65, %67 : vector<8x256xf32>
    %69 = arith.addf %60, %68 : vector<8x256xf32>
    %70 = vector.broadcast %11 : vector<8x1xf32> to vector<8x256xf32>
    %71 = arith.mulf %70, %43 : vector<8x256xf32>
    %72 = vector.broadcast %12 : vector<8x1xf32> to vector<8x256xf32>
    %73 = arith.mulf %72, %40 : vector<8x256xf32>
    %74 = arith.addf %71, %73 : vector<8x256xf32>
    %75 = vector.broadcast %13 : vector<8x1xf32> to vector<8x256xf32>
    %76 = arith.mulf %75, %46 : vector<8x256xf32>
    %77 = arith.addf %74, %76 : vector<8x256xf32>
    %c240_i32 = arith.constant 240 : i32
    %78 = tpu.dynamic_rotate %77 by %c240_i32 dim 1 : vector<8x256xf32>, i32 -> vector<8x256xf32>
    %79 = vector.broadcast %3 : vector<1x256xf32> to vector<8x256xf32>
    %80 = arith.mulf %78, %79 : vector<8x256xf32>
    %81 = arith.addf %69, %80 : vector<8x256xf32>
    %82 = vector.extract_strided_slice %81 {offsets = [0, 0], sizes = [4, 256], strides = [1, 1]} : vector<8x256xf32> to vector<4x256xf32>
    %c1_i32_23 = arith.constant 1 : i32
    %83 = tpu.dynamic_rotate %82 by %c1_i32_23 dim 1 : vector<4x256xf32>, i32 -> vector<4x256xf32>
    %84 = vector.broadcast %0 : vector<1x256xf32> to vector<4x256xf32>
    %85 = arith.mulf %83, %84 : vector<4x256xf32>
    %c255_i32_24 = arith.constant 255 : i32
    %86 = tpu.dynamic_rotate %82 by %c255_i32_24 dim 1 : vector<4x256xf32>, i32 -> vector<4x256xf32>
    %87 = vector.broadcast %1 : vector<1x256xf32> to vector<4x256xf32>
    %88 = arith.mulf %86, %87 : vector<4x256xf32>
    %89 = vector.shape_cast %35 : vector<4x1xf32> to vector<4x1xf32>
    %90 = vector.broadcast %89 : vector<4x1xf32> to vector<4x256xf32>
    %91 = vector.broadcast %15 : vector<4x1xf32> to vector<4x256xf32>
    %92 = arith.mulf %91, %85 : vector<4x256xf32>
    %93 = vector.broadcast %16 : vector<4x1xf32> to vector<4x256xf32>
    %94 = arith.mulf %93, %82 : vector<4x256xf32>
    %95 = arith.addf %92, %94 : vector<4x256xf32>
    %96 = vector.broadcast %17 : vector<4x1xf32> to vector<4x256xf32>
    %97 = arith.mulf %96, %88 : vector<4x256xf32>
    %98 = arith.addf %95, %97 : vector<4x256xf32>
    %c16_i32_25 = arith.constant 16 : i32
    %99 = tpu.dynamic_rotate %98 by %c16_i32_25 dim 1 : vector<4x256xf32>, i32 -> vector<4x256xf32>
    %100 = vector.broadcast %2 : vector<1x256xf32> to vector<4x256xf32>
    %101 = arith.mulf %99, %100 : vector<4x256xf32>
    %102 = arith.addf %90, %101 : vector<4x256xf32>
    %103 = vector.broadcast %18 : vector<4x1xf32> to vector<4x256xf32>
    %104 = arith.mulf %103, %85 : vector<4x256xf32>
    %105 = vector.broadcast %19 : vector<4x1xf32> to vector<4x256xf32>
    %106 = arith.mulf %105, %82 : vector<4x256xf32>
    %107 = arith.addf %104, %106 : vector<4x256xf32>
    %108 = vector.broadcast %20 : vector<4x1xf32> to vector<4x256xf32>
    %109 = arith.mulf %108, %88 : vector<4x256xf32>
    %110 = arith.addf %107, %109 : vector<4x256xf32>
    %111 = arith.addf %102, %110 : vector<4x256xf32>
    %112 = vector.broadcast %21 : vector<4x1xf32> to vector<4x256xf32>
    %113 = arith.mulf %112, %85 : vector<4x256xf32>
    %114 = vector.broadcast %22 : vector<4x1xf32> to vector<4x256xf32>
    %115 = arith.mulf %114, %82 : vector<4x256xf32>
    %116 = arith.addf %113, %115 : vector<4x256xf32>
    %117 = vector.broadcast %23 : vector<4x1xf32> to vector<4x256xf32>
    %118 = arith.mulf %117, %88 : vector<4x256xf32>
    %119 = arith.addf %116, %118 : vector<4x256xf32>
    %c240_i32_26 = arith.constant 240 : i32
    %120 = tpu.dynamic_rotate %119 by %c240_i32_26 dim 1 : vector<4x256xf32>, i32 -> vector<4x256xf32>
    %121 = vector.broadcast %3 : vector<1x256xf32> to vector<4x256xf32>
    %122 = arith.mulf %120, %121 : vector<4x256xf32>
    %123 = arith.addf %111, %122 : vector<4x256xf32>
    %124 = vector.extract_strided_slice %123 {offsets = [0, 0], sizes = [2, 256], strides = [1, 1]} : vector<4x256xf32> to vector<2x256xf32>
    %c1_i32_27 = arith.constant 1 : i32
    %125 = tpu.dynamic_rotate %124 by %c1_i32_27 dim 1 : vector<2x256xf32>, i32 -> vector<2x256xf32>
    %126 = vector.broadcast %0 : vector<1x256xf32> to vector<2x256xf32>
    %127 = arith.mulf %125, %126 : vector<2x256xf32>
    %c255_i32_28 = arith.constant 255 : i32
    %128 = tpu.dynamic_rotate %124 by %c255_i32_28 dim 1 : vector<2x256xf32>, i32 -> vector<2x256xf32>
    %129 = vector.broadcast %1 : vector<1x256xf32> to vector<2x256xf32>
    %130 = arith.mulf %128, %129 : vector<2x256xf32>
    %131 = vector.shape_cast %36 : vector<2x1xf32> to vector<2x1xf32>
    %132 = vector.broadcast %131 : vector<2x1xf32> to vector<2x256xf32>
    %133 = vector.broadcast %25 : vector<2x1xf32> to vector<2x256xf32>
    %134 = arith.mulf %133, %127 : vector<2x256xf32>
    %135 = vector.broadcast %26 : vector<2x1xf32> to vector<2x256xf32>
    %136 = arith.mulf %135, %124 : vector<2x256xf32>
    %137 = arith.addf %134, %136 : vector<2x256xf32>
    %138 = vector.broadcast %27 : vector<2x1xf32> to vector<2x256xf32>
    %139 = arith.mulf %138, %130 : vector<2x256xf32>
    %140 = arith.addf %137, %139 : vector<2x256xf32>
    %c16_i32_29 = arith.constant 16 : i32
    %141 = tpu.dynamic_rotate %140 by %c16_i32_29 dim 1 : vector<2x256xf32>, i32 -> vector<2x256xf32>
    %142 = vector.broadcast %2 : vector<1x256xf32> to vector<2x256xf32>
    %143 = arith.mulf %141, %142 : vector<2x256xf32>
    %144 = arith.addf %132, %143 : vector<2x256xf32>
    %145 = vector.broadcast %28 : vector<2x1xf32> to vector<2x256xf32>
    %146 = arith.mulf %145, %127 : vector<2x256xf32>
    %147 = vector.broadcast %29 : vector<2x1xf32> to vector<2x256xf32>
    %148 = arith.mulf %147, %124 : vector<2x256xf32>
    %149 = arith.addf %146, %148 : vector<2x256xf32>
    %150 = vector.broadcast %30 : vector<2x1xf32> to vector<2x256xf32>
    %151 = arith.mulf %150, %130 : vector<2x256xf32>
    %152 = arith.addf %149, %151 : vector<2x256xf32>
    %153 = arith.addf %144, %152 : vector<2x256xf32>
    %154 = vector.broadcast %31 : vector<2x1xf32> to vector<2x256xf32>
    %155 = arith.mulf %154, %127 : vector<2x256xf32>
    %156 = vector.broadcast %32 : vector<2x1xf32> to vector<2x256xf32>
    %157 = arith.mulf %156, %124 : vector<2x256xf32>
    %158 = arith.addf %155, %157 : vector<2x256xf32>
    %159 = vector.broadcast %33 : vector<2x1xf32> to vector<2x256xf32>
    %160 = arith.mulf %159, %130 : vector<2x256xf32>
    %161 = arith.addf %158, %160 : vector<2x256xf32>
    %c240_i32_30 = arith.constant 240 : i32
    %162 = tpu.dynamic_rotate %161 by %c240_i32_30 dim 1 : vector<2x256xf32>, i32 -> vector<2x256xf32>
    %163 = vector.broadcast %3 : vector<1x256xf32> to vector<2x256xf32>
    %164 = arith.mulf %162, %163 : vector<2x256xf32>
    %165 = arith.addf %153, %164 : vector<2x256xf32>
    %166 = arith.truncf %40 : vector<8x256xf32> to vector<8x256xbf16>
    %cst = arith.constant dense<0.000000e+00> : vector<8x256xf32>
    %167 = tpu.matmul %37, %166, %cst {dimension_numbers = #tpu.dot_dimension_numbers<[1], [0], [0], [1], [0, 0, 1, 1], [], []>} : vector<8x8xbf16>, vector<8x256xbf16>, vector<8x256xf32> -> vector<8x256xf32>
    %168 = vector.broadcast %38 : vector<8x1xf32> to vector<8x256xf32>
    %169 = arith.addf %167, %168 : vector<8x256xf32>
    %170 = arith.negf %169 : vector<8x256xf32>
    %171 = math.exp %170 : vector<8x256xf32>
    %cst_31 = arith.constant 1.000000e+00 : f32
    %172 = vector.broadcast %cst_31 : f32 to vector<8x256xf32>
    %173 = arith.addf %172, %171 : vector<8x256xf32>
    %174 = arith.divf %172, %173 : vector<8x256xf32>
    %175 = vector.extract_strided_slice %81 {offsets = [4, 0], sizes = [4, 256], strides = [1, 1]} : vector<8x256xf32> to vector<4x256xf32>
    %176 = vector.extract_strided_slice %123 {offsets = [2, 0], sizes = [2, 256], strides = [1, 1]} : vector<4x256xf32> to vector<2x256xf32>
    %177 = tpu.concatenate %175, %176, %165 in 0 : vector<4x256xf32>, vector<2x256xf32>, vector<2x256xf32> -> vector<8x256xf32>
    %178 = arith.mulf %174, %177 : vector<8x256xf32>
    %c0_32 = arith.constant 0 : index
    %c0_33 = arith.constant 0 : index
    %c0_34 = arith.constant 0 : index
    %179 = vector.load %arg11[%c0_32, %c0_33, %c0_34] : memref<2x8x256xf32, #tpu.memory_space<vmem>>, vector<1x8x256xf32>
    %180 = vector.shape_cast %179 : vector<1x8x256xf32> to vector<8x256xf32>
    %181 = vector.shape_cast %178 : vector<8x256xf32> to vector<1x8x256xf32>
    tpu.vector_store %arg11[%c0_32, %c0_33, %c0_34], %181 {strides = array<i32>} : memref<2x8x256xf32, #tpu.memory_space<vmem>>, vector<1x8x256xf32>,
    %c1_35 = arith.constant 1 : index
    %c0_36 = arith.constant 0 : index
    %c0_37 = arith.constant 0 : index
    %182 = vector.load %arg1[%c1_35, %c0_36, %c0_37] : memref<2x8x256xf32, #tpu.memory_space<vmem>>, vector<1x8x256xf32>
    %183 = vector.shape_cast %182 : vector<1x8x256xf32> to vector<8x256xf32>
    %c1_i32_38 = arith.constant 1 : i32
    %184 = tpu.dynamic_rotate %183 by %c1_i32_38 dim 1 : vector<8x256xf32>, i32 -> vector<8x256xf32>
    %185 = vector.broadcast %0 : vector<1x256xf32> to vector<8x256xf32>
    %186 = arith.mulf %184, %185 : vector<8x256xf32>
    %c255_i32_39 = arith.constant 255 : i32
    %187 = tpu.dynamic_rotate %183 by %c255_i32_39 dim 1 : vector<8x256xf32>, i32 -> vector<8x256xf32>
    %188 = vector.broadcast %1 : vector<1x256xf32> to vector<8x256xf32>
    %189 = arith.mulf %187, %188 : vector<8x256xf32>
    %190 = vector.shape_cast %34 : vector<8x1xf32> to vector<8x1xf32>
    %191 = vector.broadcast %190 : vector<8x1xf32> to vector<8x256xf32>
    %192 = vector.broadcast %5 : vector<8x1xf32> to vector<8x256xf32>
    %193 = arith.mulf %192, %186 : vector<8x256xf32>
    %194 = vector.broadcast %6 : vector<8x1xf32> to vector<8x256xf32>
    %195 = arith.mulf %194, %183 : vector<8x256xf32>
    %196 = arith.addf %193, %195 : vector<8x256xf32>
    %197 = vector.broadcast %7 : vector<8x1xf32> to vector<8x256xf32>
    %198 = arith.mulf %197, %189 : vector<8x256xf32>
    %199 = arith.addf %196, %198 : vector<8x256xf32>
    %c16_i32_40 = arith.constant 16 : i32
    %200 = tpu.dynamic_rotate %199 by %c16_i32_40 dim 1 : vector<8x256xf32>, i32 -> vector<8x256xf32>
    %201 = vector.broadcast %2 : vector<1x256xf32> to vector<8x256xf32>
    %202 = arith.mulf %200, %201 : vector<8x256xf32>
    %203 = arith.addf %191, %202 : vector<8x256xf32>
    %204 = vector.broadcast %8 : vector<8x1xf32> to vector<8x256xf32>
    %205 = arith.mulf %204, %186 : vector<8x256xf32>
    %206 = vector.broadcast %9 : vector<8x1xf32> to vector<8x256xf32>
    %207 = arith.mulf %206, %183 : vector<8x256xf32>
    %208 = arith.addf %205, %207 : vector<8x256xf32>
    %209 = vector.broadcast %10 : vector<8x1xf32> to vector<8x256xf32>
    %210 = arith.mulf %209, %189 : vector<8x256xf32>
    %211 = arith.addf %208, %210 : vector<8x256xf32>
    %212 = arith.addf %203, %211 : vector<8x256xf32>
    %213 = vector.broadcast %11 : vector<8x1xf32> to vector<8x256xf32>
    %214 = arith.mulf %213, %186 : vector<8x256xf32>
    %215 = vector.broadcast %12 : vector<8x1xf32> to vector<8x256xf32>
    %216 = arith.mulf %215, %183 : vector<8x256xf32>
    %217 = arith.addf %214, %216 : vector<8x256xf32>
    %218 = vector.broadcast %13 : vector<8x1xf32> to vector<8x256xf32>
    %219 = arith.mulf %218, %189 : vector<8x256xf32>
    %220 = arith.addf %217, %219 : vector<8x256xf32>
    %c240_i32_41 = arith.constant 240 : i32
    %221 = tpu.dynamic_rotate %220 by %c240_i32_41 dim 1 : vector<8x256xf32>, i32 -> vector<8x256xf32>
    %222 = vector.broadcast %3 : vector<1x256xf32> to vector<8x256xf32>
    %223 = arith.mulf %221, %222 : vector<8x256xf32>
    %224 = arith.addf %212, %223 : vector<8x256xf32>
    %225 = vector.extract_strided_slice %224 {offsets = [0, 0], sizes = [4, 256], strides = [1, 1]} : vector<8x256xf32> to vector<4x256xf32>
    %c1_i32_42 = arith.constant 1 : i32
    %226 = tpu.dynamic_rotate %225 by %c1_i32_42 dim 1 : vector<4x256xf32>, i32 -> vector<4x256xf32>
    %227 = vector.broadcast %0 : vector<1x256xf32> to vector<4x256xf32>
    %228 = arith.mulf %226, %227 : vector<4x256xf32>
    %c255_i32_43 = arith.constant 255 : i32
    %229 = tpu.dynamic_rotate %225 by %c255_i32_43 dim 1 : vector<4x256xf32>, i32 -> vector<4x256xf32>
    %230 = vector.broadcast %1 : vector<1x256xf32> to vector<4x256xf32>
    %231 = arith.mulf %229, %230 : vector<4x256xf32>
    %232 = vector.shape_cast %35 : vector<4x1xf32> to vector<4x1xf32>
    %233 = vector.broadcast %232 : vector<4x1xf32> to vector<4x256xf32>
    %234 = vector.broadcast %15 : vector<4x1xf32> to vector<4x256xf32>
    %235 = arith.mulf %234, %228 : vector<4x256xf32>
    %236 = vector.broadcast %16 : vector<4x1xf32> to vector<4x256xf32>
    %237 = arith.mulf %236, %225 : vector<4x256xf32>
    %238 = arith.addf %235, %237 : vector<4x256xf32>
    %239 = vector.broadcast %17 : vector<4x1xf32> to vector<4x256xf32>
    %240 = arith.mulf %239, %231 : vector<4x256xf32>
    %241 = arith.addf %238, %240 : vector<4x256xf32>
    %c16_i32_44 = arith.constant 16 : i32
    %242 = tpu.dynamic_rotate %241 by %c16_i32_44 dim 1 : vector<4x256xf32>, i32 -> vector<4x256xf32>
    %243 = vector.broadcast %2 : vector<1x256xf32> to vector<4x256xf32>
    %244 = arith.mulf %242, %243 : vector<4x256xf32>
    %245 = arith.addf %233, %244 : vector<4x256xf32>
    %246 = vector.broadcast %18 : vector<4x1xf32> to vector<4x256xf32>
    %247 = arith.mulf %246, %228 : vector<4x256xf32>
    %248 = vector.broadcast %19 : vector<4x1xf32> to vector<4x256xf32>
    %249 = arith.mulf %248, %225 : vector<4x256xf32>
    %250 = arith.addf %247, %249 : vector<4x256xf32>
    %251 = vector.broadcast %20 : vector<4x1xf32> to vector<4x256xf32>
    %252 = arith.mulf %251, %231 : vector<4x256xf32>
    %253 = arith.addf %250, %252 : vector<4x256xf32>
    %254 = arith.addf %245, %253 : vector<4x256xf32>
    %255 = vector.broadcast %21 : vector<4x1xf32> to vector<4x256xf32>
    %256 = arith.mulf %255, %228 : vector<4x256xf32>
    %257 = vector.broadcast %22 : vector<4x1xf32> to vector<4x256xf32>
    %258 = arith.mulf %257, %225 : vector<4x256xf32>
    %259 = arith.addf %256, %258 : vector<4x256xf32>
    %260 = vector.broadcast %23 : vector<4x1xf32> to vector<4x256xf32>
    %261 = arith.mulf %260, %231 : vector<4x256xf32>
    %262 = arith.addf %259, %261 : vector<4x256xf32>
    %c240_i32_45 = arith.constant 240 : i32
    %263 = tpu.dynamic_rotate %262 by %c240_i32_45 dim 1 : vector<4x256xf32>, i32 -> vector<4x256xf32>
    %264 = vector.broadcast %3 : vector<1x256xf32> to vector<4x256xf32>
    %265 = arith.mulf %263, %264 : vector<4x256xf32>
    %266 = arith.addf %254, %265 : vector<4x256xf32>
    %267 = vector.extract_strided_slice %266 {offsets = [0, 0], sizes = [2, 256], strides = [1, 1]} : vector<4x256xf32> to vector<2x256xf32>
    %c1_i32_46 = arith.constant 1 : i32
    %268 = tpu.dynamic_rotate %267 by %c1_i32_46 dim 1 : vector<2x256xf32>, i32 -> vector<2x256xf32>
    %269 = vector.broadcast %0 : vector<1x256xf32> to vector<2x256xf32>
    %270 = arith.mulf %268, %269 : vector<2x256xf32>
    %c255_i32_47 = arith.constant 255 : i32
    %271 = tpu.dynamic_rotate %267 by %c255_i32_47 dim 1 : vector<2x256xf32>, i32 -> vector<2x256xf32>
    %272 = vector.broadcast %1 : vector<1x256xf32> to vector<2x256xf32>
    %273 = arith.mulf %271, %272 : vector<2x256xf32>
    %274 = vector.shape_cast %36 : vector<2x1xf32> to vector<2x1xf32>
    %275 = vector.broadcast %274 : vector<2x1xf32> to vector<2x256xf32>
    %276 = vector.broadcast %25 : vector<2x1xf32> to vector<2x256xf32>
    %277 = arith.mulf %276, %270 : vector<2x256xf32>
    %278 = vector.broadcast %26 : vector<2x1xf32> to vector<2x256xf32>
    %279 = arith.mulf %278, %267 : vector<2x256xf32>
    %280 = arith.addf %277, %279 : vector<2x256xf32>
    %281 = vector.broadcast %27 : vector<2x1xf32> to vector<2x256xf32>
    %282 = arith.mulf %281, %273 : vector<2x256xf32>
    %283 = arith.addf %280, %282 : vector<2x256xf32>
    %c16_i32_48 = arith.constant 16 : i32
    %284 = tpu.dynamic_rotate %283 by %c16_i32_48 dim 1 : vector<2x256xf32>, i32 -> vector<2x256xf32>
    %285 = vector.broadcast %2 : vector<1x256xf32> to vector<2x256xf32>
    %286 = arith.mulf %284, %285 : vector<2x256xf32>
    %287 = arith.addf %275, %286 : vector<2x256xf32>
    %288 = vector.broadcast %28 : vector<2x1xf32> to vector<2x256xf32>
    %289 = arith.mulf %288, %270 : vector<2x256xf32>
    %290 = vector.broadcast %29 : vector<2x1xf32> to vector<2x256xf32>
    %291 = arith.mulf %290, %267 : vector<2x256xf32>
    %292 = arith.addf %289, %291 : vector<2x256xf32>
    %293 = vector.broadcast %30 : vector<2x1xf32> to vector<2x256xf32>
    %294 = arith.mulf %293, %273 : vector<2x256xf32>
    %295 = arith.addf %292, %294 : vector<2x256xf32>
    %296 = arith.addf %287, %295 : vector<2x256xf32>
    %297 = vector.broadcast %31 : vector<2x1xf32> to vector<2x256xf32>
    %298 = arith.mulf %297, %270 : vector<2x256xf32>
    %299 = vector.broadcast %32 : vector<2x1xf32> to vector<2x256xf32>
    %300 = arith.mulf %299, %267 : vector<2x256xf32>
    %301 = arith.addf %298, %300 : vector<2x256xf32>
    %302 = vector.broadcast %33 : vector<2x1xf32> to vector<2x256xf32>
    %303 = arith.mulf %302, %273 : vector<2x256xf32>
    %304 = arith.addf %301, %303 : vector<2x256xf32>
    %c240_i32_49 = arith.constant 240 : i32
    %305 = tpu.dynamic_rotate %304 by %c240_i32_49 dim 1 : vector<2x256xf32>, i32 -> vector<2x256xf32>
    %306 = vector.broadcast %3 : vector<1x256xf32> to vector<2x256xf32>
    %307 = arith.mulf %305, %306 : vector<2x256xf32>
    %308 = arith.addf %296, %307 : vector<2x256xf32>
    %309 = arith.truncf %183 : vector<8x256xf32> to vector<8x256xbf16>
    %cst_50 = arith.constant dense<0.000000e+00> : vector<8x256xf32>
    %310 = tpu.matmul %37, %309, %cst_50 {dimension_numbers = #tpu.dot_dimension_numbers<[1], [0], [0], [1], [0, 0, 1, 1], [], []>} : vector<8x8xbf16>, vector<8x256xbf16>, vector<8x256xf32> -> vector<8x256xf32>
    %311 = vector.broadcast %38 : vector<8x1xf32> to vector<8x256xf32>
    %312 = arith.addf %310, %311 : vector<8x256xf32>
    %313 = arith.negf %312 : vector<8x256xf32>
    %314 = math.exp %313 : vector<8x256xf32>
    %cst_51 = arith.constant 1.000000e+00 : f32
    %315 = vector.broadcast %cst_51 : f32 to vector<8x256xf32>
    %316 = arith.addf %315, %314 : vector<8x256xf32>
    %317 = arith.divf %315, %316 : vector<8x256xf32>
    %318 = vector.extract_strided_slice %224 {offsets = [4, 0], sizes = [4, 256], strides = [1, 1]} : vector<8x256xf32> to vector<4x256xf32>
    %319 = vector.extract_strided_slice %266 {offsets = [2, 0], sizes = [2, 256], strides = [1, 1]} : vector<4x256xf32> to vector<2x256xf32>
    %320 = tpu.concatenate %318, %319, %308 in 0 : vector<4x256xf32>, vector<2x256xf32>, vector<2x256xf32> -> vector<8x256xf32>
    %321 = arith.mulf %317, %320 : vector<8x256xf32>
    %c1_52 = arith.constant 1 : index
    %c0_53 = arith.constant 0 : index
    %c0_54 = arith.constant 0 : index
    %322 = vector.load %arg11[%c1_52, %c0_53, %c0_54] : memref<2x8x256xf32, #tpu.memory_space<vmem>>, vector<1x8x256xf32>
    %323 = vector.shape_cast %322 : vector<1x8x256xf32> to vector<8x256xf32>
    %324 = vector.shape_cast %321 : vector<8x256xf32> to vector<1x8x256xf32>
    tpu.vector_store %arg11[%c1_52, %c0_53, %c0_54], %324 {strides = array<i32>} : memref<2x8x256xf32, #tpu.memory_space<vmem>>, vector<1x8x256xf32>,
    return
  }
  func.func @transform_0(%arg0: i32) -> (i32, i32, i32) {
    %c0_i32 = arith.constant 0 : i32
    %c0_i32_0 = arith.constant 0 : i32
    %c0_i32_1 = arith.constant 0 : i32
    return %arg0, %c0_i32, %c0_i32_0 : i32, i32, i32
  }
  func.func @transform_1(%arg0: i32) -> (i32, i32) {
    %c0_i32 = arith.constant 0 : i32
    %c0_i32_0 = arith.constant 0 : i32
    %c0_i32_1 = arith.constant 0 : i32
    return %c0_i32, %c0_i32_0 : i32, i32
  }
  func.func @transform_2(%arg0: i32) -> (i32, i32) {
    %c0_i32 = arith.constant 0 : i32
    %c0_i32_0 = arith.constant 0 : i32
    %c0_i32_1 = arith.constant 0 : i32
    return %c0_i32, %c0_i32_0 : i32, i32
  }
  func.func @transform_3(%arg0: i32) -> (i32, i32) {
    %c0_i32 = arith.constant 0 : i32
    %c0_i32_0 = arith.constant 0 : i32
    %c0_i32_1 = arith.constant 0 : i32
    return %c0_i32, %c0_i32_0 : i32, i32
  }
  func.func @transform_4(%arg0: i32) -> (i32, i32) {
    %c0_i32 = arith.constant 0 : i32
    %c0_i32_0 = arith.constant 0 : i32
    %c0_i32_1 = arith.constant 0 : i32
    return %c0_i32, %c0_i32_0 : i32, i32
  }
  func.func @transform_5(%arg0: i32) -> (i32, i32) {
    %c0_i32 = arith.constant 0 : i32
    %c0_i32_0 = arith.constant 0 : i32
    %c0_i32_1 = arith.constant 0 : i32
    return %c0_i32, %c0_i32_0 : i32, i32
  }
  func.func @transform_6(%arg0: i32) -> (i32, i32) {
    %c0_i32 = arith.constant 0 : i32
    %c0_i32_0 = arith.constant 0 : i32
    %c0_i32_1 = arith.constant 0 : i32
    return %c0_i32, %c0_i32_0 : i32, i32
  }
  func.func @transform_7(%arg0: i32) -> (i32, i32) {
    %c0_i32 = arith.constant 0 : i32
    %c0_i32_0 = arith.constant 0 : i32
    %c0_i32_1 = arith.constant 0 : i32
    return %c0_i32, %c0_i32_0 : i32, i32
  }
  func.func @transform_8(%arg0: i32) -> (i32, i32) {
    %c0_i32 = arith.constant 0 : i32
    %c0_i32_0 = arith.constant 0 : i32
    %c0_i32_1 = arith.constant 0 : i32
    return %c0_i32, %c0_i32_0 : i32, i32
  }
  func.func @transform_9(%arg0: i32) -> (i32, i32) {
    %c0_i32 = arith.constant 0 : i32
    %c0_i32_0 = arith.constant 0 : i32
    %c0_i32_1 = arith.constant 0 : i32
    return %c0_i32, %c0_i32_0 : i32, i32
  }
  func.func @transform_10(%arg0: i32) -> (i32, i32, i32) {
    %c0_i32 = arith.constant 0 : i32
    %c0_i32_0 = arith.constant 0 : i32
    %c0_i32_1 = arith.constant 0 : i32
    return %arg0, %c0_i32, %c0_i32_0 : i32, i32, i32
  }
}

</mosaic_0001>

<llo_original>
// kernel: tpu_custom_call.1
$region0: #{tpu_custom_call.1}
  #allocation0 [shape = 'u32[]', space=smem, size = 0x4, offset = 0x4, fixed_abs, tag = 'smem constant byte address 0x4 - core index']
  #allocation1 [shape = 'u32[144,128]{1,0:T(1,128)}', space=vmem, size = 0x12000, scoped, tag = 'internal scratch']
  %s0 = inlined_call_operand.hbm [shape: f32[2,8,256], index: 0, kind: input, shape index: {}]
  %s1 = inlined_call_operand.vmem [shape: f32[4,256], index: 1, kind: input, shape index: {}]
  %s2 = inlined_call_operand.vmem [shape: f32[8,9], index: 2, kind: input, shape index: {}]
  %s3 = inlined_call_operand.vmem [shape: f32[8,1], index: 3, kind: input, shape index: {}]
  %s4 = inlined_call_operand.vmem [shape: f32[4,9], index: 4, kind: input, shape index: {}]
  %s5 = inlined_call_operand.vmem [shape: f32[4,1], index: 5, kind: input, shape index: {}]
  %s6 = inlined_call_operand.vmem [shape: f32[2,9], index: 6, kind: input, shape index: {}]
  %s7 = inlined_call_operand.vmem [shape: f32[2,1], index: 7, kind: input, shape index: {}]
  %s8 = inlined_call_operand.vmem [shape: bf16[8,8], index: 8, kind: input, shape index: {}]
  %s9 = inlined_call_operand.vmem [shape: f32[8,1], index: 9, kind: input, shape index: {}]
  %s10 = inlined_call_operand.hbm [shape: f32[2,8,256], index: 10, kind: output, shape index: {}]
  %s11 = sld [smem:[#allocation0]]
  $region54: #{tpu_custom_call.1} parent=0
    _
  %s13 = ssub.s32 1, %s11
  %s14 = scalar_select 0, %s13, %s11
  $region1: #{tpu_custom_call.1} parent=0
    #allocation2 [shape = 'u8[16384]{0}', space=vmem, size = 0x4000, scoped, tag = 'input window, operand 0, single buffered']
    #allocation3 [shape = 's32[1]{0}', space=sflag, size = 0x4, scoped, tag = 'scoped memory for tpu_custom_call.1']
    #allocation4 [shape = 's32[1]{0}', space=sflag, size = 0x4, scoped, tag = 'scoped memory for tpu_custom_call.1']
    #allocation5 [shape = 'u8[16384]{0}', space=vmem, size = 0x4000, scoped, tag = 'output window, operand 0, single buffered']
    %15 = vsyncpa [#allocation3], 0
    %16 = vsyncpa [#allocation4], 0
    // Predicated region
    $region2: #{tpu_custom_call.1} parent=1 // pred_check
      _
    $region3: #{tpu_custom_call.1} parent=1 // pred_check_branch
      %18 = sbr.rel (0) target = $region5
    $region4: #{tpu_custom_call.1} parent=1 // pred_region
      %s20 = ssub.s32 512, 512
      %21 = vsyncadd [#allocation3], %s20
      %s22 = sshll.u32 [#allocation2], 4
      %s23 = int_to_ptr.vmem [resolvable:$true] %s22
      %28 = dma.hbm_to_vmem [thread:$0]  %s0, 512, %s23, [#allocation3], 256, 256, 16
    $region5: #{tpu_custom_call.1} parent=1 // pred_fallthru
      _
    // Predicated region
    $region6: #{tpu_custom_call.1} parent=1 // pred_check
      _
    $region7: #{tpu_custom_call.1} parent=1 // pred_check_branch
      %30 = sbr.rel (0) target = $region9
    $region8: #{tpu_custom_call.1} parent=1 // pred_region
      _
    $region9: #{tpu_custom_call.1} parent=1 // pred_fallthru
      _
    // Predicated region
    $region10: #{tpu_custom_call.1} parent=1 // pred_check
      _
    $region11: #{tpu_custom_call.1} parent=1 // pred_check_branch
      %32 = sbr.rel (0) target = $region13
    $region12: #{tpu_custom_call.1} parent=1 // pred_region
      _
    $region13: #{tpu_custom_call.1} parent=1 // pred_fallthru
      _
    // Predicated region
    $region14: #{tpu_custom_call.1} parent=1 // pred_check
      _
    $region15: #{tpu_custom_call.1} parent=1 // pred_check_branch
      %34 = sbr.rel (0) target = $region17
    $region16: #{tpu_custom_call.1} parent=1 // pred_region
      _
    $region17: #{tpu_custom_call.1} parent=1 // pred_fallthru
      _
    // Predicated region
    $region18: #{tpu_custom_call.1} parent=1 // pred_check
      _
    $region19: #{tpu_custom_call.1} parent=1 // pred_check_branch
      %36 = sbr.rel (0) target = $region21
    $region20: #{tpu_custom_call.1} parent=1 // pred_region
      _
    $region21: #{tpu_custom_call.1} parent=1 // pred_fallthru
      _
    // Predicated region
    $region22: #{tpu_custom_call.1} parent=1 // pred_check
      _
    $region23: #{tpu_custom_call.1} parent=1 // pred_check_branch
      %38 = sbr.rel (0) target = $region25
    $region24: #{tpu_custom_call.1} parent=1 // pred_region
      _
    $region25: #{tpu_custom_call.1} parent=1 // pred_fallthru
      _
    // Predicated region
    $region26: #{tpu_custom_call.1} parent=1 // pred_check
      _
    $region27: #{tpu_custom_call.1} parent=1 // pred_check_branch
      %40 = sbr.rel (0) target = $region29
    $region28: #{tpu_custom_call.1} parent=1 // pred_region
      _
    $region29: #{tpu_custom_call.1} parent=1 // pred_fallthru
      _
    // Predicated region
    $region30: #{tpu_custom_call.1} parent=1 // pred_check
      _
    $region31: #{tpu_custom_call.1} parent=1 // pred_check_branch
      %42 = sbr.rel (0) target = $region33
    $region32: #{tpu_custom_call.1} parent=1 // pred_region
      _
    $region33: #{tpu_custom_call.1} parent=1 // pred_fallthru
      _
    // Predicated region
    $region34: #{tpu_custom_call.1} parent=1 // pred_check
      _
    $region35: #{tpu_custom_call.1} parent=1 // pred_check_branch
      %44 = sbr.rel (0) target = $region37
    $region36: #{tpu_custom_call.1} parent=1 // pred_region
      _
    $region37: #{tpu_custom_call.1} parent=1 // pred_fallthru
      _
    // Predicated region
    $region38: #{tpu_custom_call.1} parent=1 // pred_check
      _
    $region39: #{tpu_custom_call.1} parent=1 // pred_check_branch
      %46 = sbr.rel (0) target = $region41
    $region40: #{tpu_custom_call.1} parent=1 // pred_region
      _
    $region41: #{tpu_custom_call.1} parent=1 // pred_fallthru
      _
    // Predicated region
    $region42: #{tpu_custom_call.1} parent=1 // pred_check
      _
    $region43: #{tpu_custom_call.1} parent=1 // pred_check_branch
      %48 = sbr.rel (0) target = $region45
    $region44: #{tpu_custom_call.1} parent=1 // pred_region
      %49 = dma.done [#allocation3], 512
    $region45: #{tpu_custom_call.1} parent=1 // pred_fallthru
      _
    %v51 = vld [vmem:[%s1] ss:$4 sm:$0x3]
    %s52 = scalar_lea.vmem %s1, 1
    %v53 = vld [vmem:[%s52] ss:$4 sm:$0x3]
    %s54 = scalar_lea.vmem %s1, 2
    %v55 = vld [vmem:[%s54] ss:$4 sm:$0x3]
    %s56 = scalar_lea.vmem %s1, 3
    %v57 = vld [vmem:[%s56] ss:$4 sm:$0x3]
    %v58 = vld [vmem:[%s2] sm:$0xff]
    %v59 = vld [vmem:[%s4] sm:$0xf]
    %v60 = vld [vmem:[%s6] sm:$0x3]
    %v61 = vld [vmem:[%s3] sm:$0xff]
    %v62 = vld [vmem:[%s5] sm:$0xf]
    %v63 = vld [vmem:[%s7] sm:$0x3]
    %v64 = vld [vmem:[%s8] sm:$0xf]
    %v65 = vld [vmem:[%s9] sm:$0xff]
    %v66 = vld [vmem:[#allocation2] sm:$0xff]
    %v67 = vld [vmem:[#allocation2 + $0x8] sm:$0xff]
    %68 = vrot.lane.b32.xlu0 %v66, 1
    %v69 = vpop.permute.xlu0 %68
    %70 = vrot.lane.b32.xlu0 %v67, 1
    %v71 = vpop.permute.xlu0 %70
    %v72 = vlaneseq
    %v73 = vand.u32 %v72, 127
    %vm74 = vcmp.lt.s32.totalorder %v73, 1
    %v75 = vsel %vm74, %v69, %v71
    %v76 = vsel %vm74, %v71, %v69
    %v78 = vlaneseq
    %v79 = vshrl.u32 %v78, 7
    %v80 = vsub.s32 0, %v79
    %v81 = vrot.slane %v51, %v80
    %v82 = vlaneseq
    %v83 = vshrl.u32 %v82, 7
    %v84 = vsub.s32 1, %v83
    %v85 = vrot.slane %v51, %v84
    %v88 = vmul.f32 %v76, %v81
    %v89 = vmul.f32 %v75, %v85
    %90 = vrot.lane.b32.xlu0 %v66, 127
    %v91 = vpop.permute.xlu0 %90
    %92 = vrot.lane.b32.xlu0 %v67, 127
    %v93 = vpop.permute.xlu0 %92
    %vm94 = vcmp.lt.s32.totalorder %v73, 127
    %v95 = vsel %vm94, %v91, %v93
    %v96 = vsel %vm94, %v93, %v91
    %v98 = vlaneseq
    %v99 = vshrl.u32 %v98, 7
    %v100 = vsub.s32 0, %v99
    %v101 = vrot.slane %v53, %v100
    %v102 = vlaneseq
    %v103 = vshrl.u32 %v102, 7
    %v104 = vsub.s32 1, %v103
    %v105 = vrot.slane %v53, %v104
    %v108 = vmul.f32 %v95, %v101
    %v109 = vmul.f32 %v96, %v105
    %111 = vset.pattern.permute.xlu0 0
    %112 = vperm.xlu0 %111, %v61
    %v113 = vpop.permute.xlu0 %112
    %116 = vset.pattern.permute.xlu0 0
    %117 = vperm.xlu0 %116, %v58
    %v118 = vpop.permute.xlu0 %117
    %v120 = vmul.f32 %v118, %v88
    %v121 = vmul.f32 %v118, %v89
    %122 = vset.pattern.permute.xlu0 1
    %123 = vperm.xlu0 %122, %v58
    %v124 = vpop.permute.xlu0 %123
    %v126 = vmul.f32 %v124, %v66
    %v127 = vmul.f32 %v124, %v67
    %v128 = vadd.f32 %v120, %v126
    %v129 = vadd.f32 %v121, %v127
    %130 = vset.pattern.permute.xlu0 2
    %131 = vperm.xlu0 %130, %v58
    %v132 = vpop.permute.xlu0 %131
    %v134 = vmul.f32 %v132, %v108
    %v135 = vmul.f32 %v132, %v109
    %v136 = vadd.f32 %v128, %v134
    %v137 = vadd.f32 %v129, %v135
    %138 = vrot.lane.b32.xlu0 %v136, 16
    %v139 = vpop.permute.xlu0 %138
    %140 = vrot.lane.b32.xlu0 %v137, 16
    %v141 = vpop.permute.xlu0 %140
    %vm142 = vcmp.lt.s32.totalorder %v73, 16
    %v143 = vsel %vm142, %v139, %v141
    %v144 = vsel %vm142, %v141, %v139
    %v146 = vlaneseq
    %v147 = vshrl.u32 %v146, 7
    %v148 = vsub.s32 0, %v147
    %v149 = vrot.slane %v55, %v148
    %v150 = vlaneseq
    %v151 = vshrl.u32 %v150, 7
    %v152 = vsub.s32 1, %v151
    %v153 = vrot.slane %v55, %v152
    %v156 = vmul.f32 %v144, %v149
    %v157 = vmul.f32 %v143, %v153
    %v158 = vadd.f32 %v113, %v156
    %v159 = vadd.f32 %v113, %v157
    %160 = vset.pattern.permute.xlu0 3
    %161 = vperm.xlu0 %160, %v58
    %v162 = vpop.permute.xlu0 %161
    %v164 = vmul.f32 %v162, %v88
    %v165 = vmul.f32 %v162, %v89
    %166 = vset.pattern.permute.xlu0 4
    %167 = vperm.xlu0 %166, %v58
    %v168 = vpop.permute.xlu0 %167
    %v170 = vmul.f32 %v168, %v66
    %v171 = vmul.f32 %v168, %v67
    %v172 = vadd.f32 %v164, %v170
    %v173 = vadd.f32 %v165, %v171
    %174 = vset.pattern.permute.xlu0 5
    %175 = vperm.xlu0 %174, %v58
    %v176 = vpop.permute.xlu0 %175
    %v178 = vmul.f32 %v176, %v108
    %v179 = vmul.f32 %v176, %v109
    %v180 = vadd.f32 %v172, %v178
    %v181 = vadd.f32 %v173, %v179
    %v182 = vadd.f32 %v158, %v180
    %v183 = vadd.f32 %v159, %v181
    %184 = vset.pattern.permute.xlu0 6
    %185 = vperm.xlu0 %184, %v58
    %v186 = vpop.permute.xlu0 %185
    %v188 = vmul.f32 %v186, %v88
    %v189 = vmul.f32 %v186, %v89
    %190 = vset.pattern.permute.xlu0 7
    %191 = vperm.xlu0 %190, %v58
    %v192 = vpop.permute.xlu0 %191
    %v194 = vmul.f32 %v192, %v66
    %v195 = vmul.f32 %v192, %v67
    %v196 = vadd.f32 %v188, %v194
    %v197 = vadd.f32 %v189, %v195
    %198 = vset.pattern.permute.xlu0 8
    %199 = vperm.xlu0 %198, %v58
    %v200 = vpop.permute.xlu0 %199
    %v202 = vmul.f32 %v200, %v108
    %v203 = vmul.f32 %v200, %v109
    %v204 = vadd.f32 %v196, %v202
    %v205 = vadd.f32 %v197, %v203
    %206 = vrot.lane.b32.xlu0 %v204, 112
    %v207 = vpop.permute.xlu0 %206
    %208 = vrot.lane.b32.xlu0 %v205, 112
    %v209 = vpop.permute.xlu0 %208
    %vm210 = vcmp.lt.s32.totalorder %v73, 112
    %v211 = vsel %vm210, %v207, %v209
    %v212 = vsel %vm210, %v209, %v207
    %v214 = vlaneseq
    %v215 = vshrl.u32 %v214, 7
    %v216 = vsub.s32 0, %v215
    %v217 = vrot.slane %v57, %v216
    %v218 = vlaneseq
    %v219 = vshrl.u32 %v218, 7
    %v220 = vsub.s32 1, %v219
    %v221 = vrot.slane %v57, %v220
    %v224 = vmul.f32 %v211, %v217
    %v225 = vmul.f32 %v212, %v221
    %v226 = vadd.f32 %v182, %v224
    %v227 = vadd.f32 %v183, %v225
    %228 = vrot.lane.b32.xlu0 %v226, 1
    %v229 = vpop.permute.xlu0 %228
    %230 = vrot.lane.b32.xlu0 %v227, 1
    %v231 = vpop.permute.xlu0 %230
    %v232 = vsel %vm74, %v229, %v231
    %v233 = vsel %vm74, %v231, %v229
    %v234 = vmul.f32 %v233, %v81
    %v235 = vmul.f32 %v232, %v85
    %236 = vrot.lane.b32.xlu0 %v226, 127
    %v237 = vpop.permute.xlu0 %236
    %238 = vrot.lane.b32.xlu0 %v227, 127
    %v239 = vpop.permute.xlu0 %238
    %v240 = vsel %vm94, %v237, %v239
    %v241 = vsel %vm94, %v239, %v237
    %v242 = vmul.f32 %v240, %v101
    %v243 = vmul.f32 %v241, %v105
    %245 = vset.pattern.permute.xlu0 0
    %246 = vperm.xlu0 %245, %v62
    %v247 = vpop.permute.xlu0 %246
    %250 = vset.pattern.permute.xlu0 0
    %251 = vperm.xlu0 %250, %v59
    %v252 = vpop.permute.xlu0 %251
    %v254 = vmul.f32 %v252, %v234
    %v255 = vmul.f32 %v252, %v235
    %256 = vset.pattern.permute.xlu0 1
    %257 = vperm.xlu0 %256, %v59
    %v258 = vpop.permute.xlu0 %257
    %v260 = vmul.f32 %v258, %v226
    %v261 = vmul.f32 %v258, %v227
    %v262 = vadd.f32 %v254, %v260
    %v263 = vadd.f32 %v255, %v261
    %264 = vset.pattern.permute.xlu0 2
    %265 = vperm.xlu0 %264, %v59
    %v266 = vpop.permute.xlu0 %265
    %v268 = vmul.f32 %v266, %v242
    %v269 = vmul.f32 %v266, %v243
    %v270 = vadd.f32 %v262, %v268
    %v271 = vadd.f32 %v263, %v269
    %272 = vrot.lane.b32.xlu0 %v270, 16
    %v273 = vpop.permute.xlu0 %272
    %274 = vrot.lane.b32.xlu0 %v271, 16
    %v275 = vpop.permute.xlu0 %274
    %v276 = vsel %vm142, %v273, %v275
    %v277 = vsel %vm142, %v275, %v273
    %v278 = vmul.f32 %v277, %v149
    %v279 = vmul.f32 %v276, %v153
    %v280 = vadd.f32 %v247, %v278
    %v281 = vadd.f32 %v247, %v279
    %282 = vset.pattern.permute.xlu0 3
    %283 = vperm.xlu0 %282, %v59
    %v284 = vpop.permute.xlu0 %283
    %v286 = vmul.f32 %v284, %v234
    %v287 = vmul.f32 %v284, %v235
    %288 = vset.pattern.permute.xlu0 4
    %289 = vperm.xlu0 %288, %v59
    %v290 = vpop.permute.xlu0 %289
    %v292 = vmul.f32 %v290, %v226
    %v293 = vmul.f32 %v290, %v227
    %v294 = vadd.f32 %v286, %v292
    %v295 = vadd.f32 %v287, %v293
    %296 = vset.pattern.permute.xlu0 5
    %297 = vperm.xlu0 %296, %v59
    %v298 = vpop.permute.xlu0 %297
    %v300 = vmul.f32 %v298, %v242
    %v301 = vmul.f32 %v298, %v243
    %v302 = vadd.f32 %v294, %v300
    %v303 = vadd.f32 %v295, %v301
    %v304 = vadd.f32 %v280, %v302
    %v305 = vadd.f32 %v281, %v303
    %306 = vset.pattern.permute.xlu0 6
    %307 = vperm.xlu0 %306, %v59
    %v308 = vpop.permute.xlu0 %307
    %v310 = vmul.f32 %v308, %v234
    %v311 = vmul.f32 %v308, %v235
    %312 = vset.pattern.permute.xlu0 7
    %313 = vperm.xlu0 %312, %v59
    %v314 = vpop.permute.xlu0 %313
    %v316 = vmul.f32 %v314, %v226
    %v317 = vmul.f32 %v314, %v227
    %v318 = vadd.f32 %v310, %v316
    %v319 = vadd.f32 %v311, %v317
    %320 = vset.pattern.permute.xlu0 8
    %321 = vperm.xlu0 %320, %v59
    %v322 = vpop.permute.xlu0 %321
    %v324 = vmul.f32 %v322, %v242
    %v325 = vmul.f32 %v322, %v243
    %v326 = vadd.f32 %v318, %v324
    %v327 = vadd.f32 %v319, %v325
    %328 = vrot.lane.b32.xlu0 %v326, 112
    %v329 = vpop.permute.xlu0 %328
    %330 = vrot.lane.b32.xlu0 %v327, 112
    %v331 = vpop.permute.xlu0 %330
    %v332 = vsel %vm210, %v329, %v331
    %v333 = vsel %vm210, %v331, %v329
    %v334 = vmul.f32 %v332, %v217
    %v335 = vmul.f32 %v333, %v221
    %v336 = vadd.f32 %v304, %v334
    %v337 = vadd.f32 %v305, %v335
    %338 = vrot.lane.b32.xlu0 %v336, 1
    %v339 = vpop.permute.xlu0 %338
    %340 = vrot.lane.b32.xlu0 %v337, 1
    %v341 = vpop.permute.xlu0 %340
    %v342 = vsel %vm74, %v339, %v341
    %v343 = vsel %vm74, %v341, %v339
    %v344 = vmul.f32 %v343, %v81
    %v345 = vmul.f32 %v342, %v85
    %346 = vrot.lane.b32.xlu0 %v336, 127
    %v347 = vpop.permute.xlu0 %346
    %348 = vrot.lane.b32.xlu0 %v337, 127
    %v349 = vpop.permute.xlu0 %348
    %v350 = vsel %vm94, %v347, %v349
    %v351 = vsel %vm94, %v349, %v347
    %v352 = vmul.f32 %v350, %v101
    %v353 = vmul.f32 %v351, %v105
    %355 = vset.pattern.permute.xlu0 0
    %356 = vperm.xlu0 %355, %v63
    %v357 = vpop.permute.xlu0 %356
    %360 = vset.pattern.permute.xlu0 0
    %361 = vperm.xlu0 %360, %v60
    %v362 = vpop.permute.xlu0 %361
    %v364 = vmul.f32 %v362, %v344
    %v365 = vmul.f32 %v362, %v345
    %366 = vset.pattern.permute.xlu0 1
    %367 = vperm.xlu0 %366, %v60
    %v368 = vpop.permute.xlu0 %367
    %v370 = vmul.f32 %v368, %v336
    %v371 = vmul.f32 %v368, %v337
    %v372 = vadd.f32 %v364, %v370
    %v373 = vadd.f32 %v365, %v371
    %374 = vset.pattern.permute.xlu0 2
    %375 = vperm.xlu0 %374, %v60
    %v376 = vpop.permute.xlu0 %375
    %v378 = vmul.f32 %v376, %v352
    %v379 = vmul.f32 %v376, %v353
    %v380 = vadd.f32 %v372, %v378
    %v381 = vadd.f32 %v373, %v379
    %382 = vrot.lane.b32.xlu0 %v380, 16
    %v383 = vpop.permute.xlu0 %382
    %384 = vrot.lane.b32.xlu0 %v381, 16
    %v385 = vpop.permute.xlu0 %384
    %v386 = vsel %vm142, %v383, %v385
    %v387 = vsel %vm142, %v385, %v383
    %v388 = vmul.f32 %v387, %v149
    %v389 = vmul.f32 %v386, %v153
    %v390 = vadd.f32 %v357, %v388
    %v391 = vadd.f32 %v357, %v389
    %392 = vset.pattern.permute.xlu0 3
    %393 = vperm.xlu0 %392, %v60
    %v394 = vpop.permute.xlu0 %393
    %v396 = vmul.f32 %v394, %v344
    %v397 = vmul.f32 %v394, %v345
    %398 = vset.pattern.permute.xlu0 4
    %399 = vperm.xlu0 %398, %v60
    %v400 = vpop.permute.xlu0 %399
    %v402 = vmul.f32 %v400, %v336
    %v403 = vmul.f32 %v400, %v337
    %v404 = vadd.f32 %v396, %v402
    %v405 = vadd.f32 %v397, %v403
    %406 = vset.pattern.permute.xlu0 5
    %407 = vperm.xlu0 %406, %v60
    %v408 = vpop.permute.xlu0 %407
    %v410 = vmul.f32 %v408, %v352
    %v411 = vmul.f32 %v408, %v353
    %v412 = vadd.f32 %v404, %v410
    %v413 = vadd.f32 %v405, %v411
    %v414 = vadd.f32 %v390, %v412
    %v415 = vadd.f32 %v391, %v413
    %416 = vset.pattern.permute.xlu0 6
    %417 = vperm.xlu0 %416, %v60
    %v418 = vpop.permute.xlu0 %417
    %v420 = vmul.f32 %v418, %v344
    %v421 = vmul.f32 %v418, %v345
    %422 = vset.pattern.permute.xlu0 7
    %423 = vperm.xlu0 %422, %v60
    %v424 = vpop.permute.xlu0 %423
    %v426 = vmul.f32 %v424, %v336
    %v427 = vmul.f32 %v424, %v337
    %v428 = vadd.f32 %v420, %v426
    %v429 = vadd.f32 %v421, %v427
    %430 = vset.pattern.permute.xlu0 8
    %431 = vperm.xlu0 %430, %v60
    %v432 = vpop.permute.xlu0 %431
    %v434 = vmul.f32 %v432, %v352
    %v435 = vmul.f32 %v432, %v353
    %v436 = vadd.f32 %v428, %v434
    %v437 = vadd.f32 %v429, %v435
    %438 = vrot.lane.b32.xlu0 %v436, 112
    %v439 = vpop.permute.xlu0 %438
    %440 = vrot.lane.b32.xlu0 %v437, 112
    %v441 = vpop.permute.xlu0 %440
    %v442 = vsel %vm210, %v439, %v441
    %v443 = vsel %vm210, %v441, %v439
    %v444 = vmul.f32 %v442, %v217
    %v445 = vmul.f32 %v443, %v221
    %v446 = vadd.f32 %v414, %v444
    %v447 = vadd.f32 %v415, %v445
    %v448 = vpack.c.bf16 %v66, %v66
    %v449 = vpack.c.bf16 %v67, %v67
    %451 = vset.pattern.permute.xlu0 0
    %452 = vperm.xlu0 %451, %v65
    %v453 = vpop.permute.xlu0 %452
    %vm455 = vcmask 64512
    %v457 = vsel %vm455, %v64, 0
    %vm459 = vcmask 1043456
    %v461 = vsel %vm459, %v448, 0
    %v464 = vsel %vm459, %v449, 0
    %466 = vmatprep.subr.bf16.mxu0 %v464
    %467 = vmatpush1.bf16.msra.mxu0 %v461
    %468 = vmatprep.subr.bf16.mxu0 0
    %469 = vmatpush1.bf16.msra.mxu0 0
    %470 = vmatprep.subr.bf16.mxu0 0
    %471 = vmatpush1.bf16.msra.mxu0 0
    %472 = vmatprep.subr.bf16.mxu0 0
    %473 = vmatpush1.bf16.msra.mxu0 0
    %474 = vmatprep.subr.bf16.mxu0 0
    %475 = vmatpush1.bf16.msra.mxu0 0
    %476 = vmatprep.subr.bf16.mxu0 0
    %477 = vmatpush1.bf16.msra.mxu0 0
    %478 = vmatprep.subr.bf16.mxu0 0
    %479 = vmatpush1.bf16.msra.mxu0 0
    %480 = vmatprep.subr.bf16.mxu0 0
    %481 = vmatpush1.bf16.msra.mxu0 0
    %482 = vmatprep.subr.bf16.mxu0 0
    %483 = vmatpush1.bf16.msra.mxu0 0
    %484 = vmatprep.subr.bf16.mxu0 0
    %485 = vmatpush1.bf16.msra.mxu0 0
    %486 = vmatprep.subr.bf16.mxu0 0
    %487 = vmatpush1.bf16.msra.mxu0 0
    %488 = vmatprep.subr.bf16.mxu0 0
    %489 = vmatpush1.bf16.msra.mxu0 0
    %490 = vmatprep.subr.bf16.mxu0 0
    %491 = vmatpush1.bf16.msra.mxu0 0
    %492 = vmatprep.subr.bf16.mxu0 0
    %493 = vmatpush1.bf16.msra.mxu0 0
    %494 = vmatprep.subr.bf16.mxu0 0
    %495 = vmatpush1.bf16.msra.mxu0 0
    %496 = vmatprep.subr.bf16.mxu0 0
    %497 = vmatpush1.bf16.msra.mxu0 0
    %498 = vmatprep.mubr.bf16.mxu0 0
    %499 = vmatmul.mubr.bf16.gmra.mrb[0].mxu0 %v457
    %v500 = vpop.f32.mrb[0].mxu0
    %v501 = vadd.f32 %v453, %v500
    %v502 = vpop.f32.mrb[0].mxu0
    %v503 = vadd.f32 %v453, %v502
    %v504 = vpop.f32.mrb[0].mxu0
    %v505 = vpop.f32.mrb[0].mxu0
    %506 = vdwg.mxu0
    %v507 = vxor.u32 %v501, 2147483648
    %v508 = vxor.u32 %v503, 2147483648
    %v509 = vmul.f32 %v507, 1.442695
    %v510 = vpow.pop %v509
    %v511 = vmul.f32 %v508, 1.442695
    %v512 = vpow.pop %v511
    %v513 = vadd.f32 %v510, 1.0
    %v514 = vadd.f32 %v512, 1.0
    %v515 = vrcp.pop %v513
    %v516 = vmul.f32 1.0, %v515
    %v517 = vrcp.pop %v514
    %v518 = vmul.f32 1.0, %v517
    %v521 = vrot.slane %v226, 4
    %v522 = vrot.slane %v227, 4
    %v527 = vrot.slane %v336, 6
    %v528 = vrot.slane %v337, 6
    %v533 = vrot.slane %v446, 2
    %v534 = vrot.slane %v447, 2
    %v537 = vsel %vm459, %v521, %v527
    %v538 = vsel %vm459, %v522, %v528
    %vm539 = vcmask 1045504
    %v540 = vsel %vm539, %v537, %v533
    %v541 = vsel %vm539, %v538, %v534
    %v542 = vmul.f32 %v516, %v540
    %v543 = vmul.f32 %v518, %v541
    %544 = vst [vmem:[#allocation5] sm:$0xff] %v542
    %545 = vst [vmem:[#allocation5 + $0x8] sm:$0xff] %v543
    %s546 = scalar_lea.vmem [#allocation2], 16
    %v547 = vld [vmem:[%s546] sm:$0xff]
    %v548 = vld [vmem:[%s546 + $0x8] sm:$0xff]
    %549 = vrot.lane.b32.xlu0 %v547, 1
    %v550 = vpop.permute.xlu0 %549
    %551 = vrot.lane.b32.xlu0 %v548, 1
    %v552 = vpop.permute.xlu0 %551
    %v553 = vsel %vm74, %v550, %v552
    %v554 = vsel %vm74, %v552, %v550
    %v555 = vmul.f32 %v554, %v81
    %v556 = vmul.f32 %v553, %v85
    %557 = vrot.lane.b32.xlu0 %v547, 127
    %v558 = vpop.permute.xlu0 %557
    %559 = vrot.lane.b32.xlu0 %v548, 127
    %v560 = vpop.permute.xlu0 %559
    %v561 = vsel %vm94, %v558, %v560
    %v562 = vsel %vm94, %v560, %v558
    %v563 = vmul.f32 %v561, %v101
    %v564 = vmul.f32 %v562, %v105
    %v565 = vmul.f32 %v118, %v555
    %v566 = vmul.f32 %v118, %v556
    %v567 = vmul.f32 %v124, %v547
    %v568 = vmul.f32 %v124, %v548
    %v569 = vadd.f32 %v565, %v567
    %v570 = vadd.f32 %v566, %v568
    %v571 = vmul.f32 %v132, %v563
    %v572 = vmul.f32 %v132, %v564
    %v573 = vadd.f32 %v569, %v571
    %v574 = vadd.f32 %v570, %v572
    %575 = vrot.lane.b32.xlu0 %v573, 16
    %v576 = vpop.permute.xlu0 %575
    %577 = vrot.lane.b32.xlu0 %v574, 16
    %v578 = vpop.permute.xlu0 %577
    %v579 = vsel %vm142, %v576, %v578
    %v580 = vsel %vm142, %v578, %v576
    %v581 = vmul.f32 %v580, %v149
    %v582 = vmul.f32 %v579, %v153
    %v583 = vadd.f32 %v113, %v581
    %v584 = vadd.f32 %v113, %v582
    %v585 = vmul.f32 %v162, %v555
    %v586 = vmul.f32 %v162, %v556
    %v587 = vmul.f32 %v168, %v547
    %v588 = vmul.f32 %v168, %v548
    %v589 = vadd.f32 %v585, %v587
    %v590 = vadd.f32 %v586, %v588
    %v591 = vmul.f32 %v176, %v563
    %v592 = vmul.f32 %v176, %v564
    %v593 = vadd.f32 %v589, %v591
    %v594 = vadd.f32 %v590, %v592
    %v595 = vadd.f32 %v583, %v593
    %v596 = vadd.f32 %v584, %v594
    %v597 = vmul.f32 %v186, %v555
    %v598 = vmul.f32 %v186, %v556
    %v599 = vmul.f32 %v192, %v547
    %v600 = vmul.f32 %v192, %v548
    %v601 = vadd.f32 %v597, %v599
    %v602 = vadd.f32 %v598, %v600
    %v603 = vmul.f32 %v200, %v563
    %v604 = vmul.f32 %v200, %v564
    %v605 = vadd.f32 %v601, %v603
    %v606 = vadd.f32 %v602, %v604
    %607 = vrot.lane.b32.xlu0 %v605, 112
    %v608 = vpop.permute.xlu0 %607
    %609 = vrot.lane.b32.xlu0 %v606, 112
    %v610 = vpop.permute.xlu0 %609
    %v611 = vsel %vm210, %v608, %v610
    %v612 = vsel %vm210, %v610, %v608
    %v613 = vmul.f32 %v611, %v217
    %v614 = vmul.f32 %v612, %v221
    %v615 = vadd.f32 %v595, %v613
    %v616 = vadd.f32 %v596, %v614
    %617 = vrot.lane.b32.xlu0 %v615, 1
    %v618 = vpop.permute.xlu0 %617
    %619 = vrot.lane.b32.xlu0 %v616, 1
    %v620 = vpop.permute.xlu0 %619
    %v621 = vsel %vm74, %v618, %v620
    %v622 = vsel %vm74, %v620, %v618
    %v623 = vmul.f32 %v622, %v81
    %v624 = vmul.f32 %v621, %v85
    %625 = vrot.lane.b32.xlu0 %v615, 127
    %v626 = vpop.permute.xlu0 %625
    %627 = vrot.lane.b32.xlu0 %v616, 127
    %v628 = vpop.permute.xlu0 %627
    %v629 = vsel %vm94, %v626, %v628
    %v630 = vsel %vm94, %v628, %v626
    %v631 = vmul.f32 %v629, %v101
    %v632 = vmul.f32 %v630, %v105
    %v633 = vmul.f32 %v252, %v623
    %v634 = vmul.f32 %v252, %v624
    %v635 = vmul.f32 %v258, %v615
    %v636 = vmul.f32 %v258, %v616
    %v637 = vadd.f32 %v633, %v635
    %v638 = vadd.f32 %v634, %v636
    %v639 = vmul.f32 %v266, %v631
    %v640 = vmul.f32 %v266, %v632
    %v641 = vadd.f32 %v637, %v639
    %v642 = vadd.f32 %v638, %v640
    %643 = vrot.lane.b32.xlu0 %v641, 16
    %v644 = vpop.permute.xlu0 %643
    %645 = vrot.lane.b32.xlu0 %v642, 16
    %v646 = vpop.permute.xlu0 %645
    %v647 = vsel %vm142, %v644, %v646
    %v648 = vsel %vm142, %v646, %v644
    %v649 = vmul.f32 %v648, %v149
    %v650 = vmul.f32 %v647, %v153
    %v651 = vadd.f32 %v247, %v649
    %v652 = vadd.f32 %v247, %v650
    %v653 = vmul.f32 %v284, %v623
    %v654 = vmul.f32 %v284, %v624
    %v655 = vmul.f32 %v290, %v615
    %v656 = vmul.f32 %v290, %v616
    %v657 = vadd.f32 %v653, %v655
    %v658 = vadd.f32 %v654, %v656
    %v659 = vmul.f32 %v298, %v631
    %v660 = vmul.f32 %v298, %v632
    %v661 = vadd.f32 %v657, %v659
    %v662 = vadd.f32 %v658, %v660
    %v663 = vadd.f32 %v651, %v661
    %v664 = vadd.f32 %v652, %v662
    %v665 = vmul.f32 %v308, %v623
    %v666 = vmul.f32 %v308, %v624
    %v667 = vmul.f32 %v314, %v615
    %v668 = vmul.f32 %v314, %v616
    %v669 = vadd.f32 %v665, %v667
    %v670 = vadd.f32 %v666, %v668
    %v671 = vmul.f32 %v322, %v631
    %v672 = vmul.f32 %v322, %v632
    %v673 = vadd.f32 %v669, %v671
    %v674 = vadd.f32 %v670, %v672
    %675 = vrot.lane.b32.xlu0 %v673, 112
    %v676 = vpop.permute.xlu0 %675
    %677 = vrot.lane.b32.xlu0 %v674, 112
    %v678 = vpop.permute.xlu0 %677
    %v679 = vsel %vm210, %v676, %v678
    %v680 = vsel %vm210, %v678, %v676
    %v681 = vmul.f32 %v679, %v217
    %v682 = vmul.f32 %v680, %v221
    %v683 = vadd.f32 %v663, %v681
    %v684 = vadd.f32 %v664, %v682
    %685 = vrot.lane.b32.xlu0 %v683, 1
    %v686 = vpop.permute.xlu0 %685
    %687 = vrot.lane.b32.xlu0 %v684, 1
    %v688 = vpop.permute.xlu0 %687
    %v689 = vsel %vm74, %v686, %v688
    %v690 = vsel %vm74, %v688, %v686
    %v691 = vmul.f32 %v690, %v81
    %v692 = vmul.f32 %v689, %v85
    %693 = vrot.lane.b32.xlu0 %v683, 127
    %v694 = vpop.permute.xlu0 %693
    %695 = vrot.lane.b32.xlu0 %v684, 127
    %v696 = vpop.permute.xlu0 %695
    %v697 = vsel %vm94, %v694, %v696
    %v698 = vsel %vm94, %v696, %v694
    %v699 = vmul.f32 %v697, %v101
    %v700 = vmul.f32 %v698, %v105
    %v701 = vmul.f32 %v362, %v691
    %v702 = vmul.f32 %v362, %v692
    %v703 = vmul.f32 %v368, %v683
    %v704 = vmul.f32 %v368, %v684
    %v705 = vadd.f32 %v701, %v703
    %v706 = vadd.f32 %v702, %v704
    %v707 = vmul.f32 %v376, %v699
    %v708 = vmul.f32 %v376, %v700
    %v709 = vadd.f32 %v705, %v707
    %v710 = vadd.f32 %v706, %v708
    %711 = vrot.lane.b32.xlu0 %v709, 16
    %v712 = vpop.permute.xlu0 %711
    %713 = vrot.lane.b32.xlu0 %v710, 16
    %v714 = vpop.permute.xlu0 %713
    %v715 = vsel %vm142, %v712, %v714
    %v716 = vsel %vm142, %v714, %v712
    %v717 = vmul.f32 %v716, %v149
    %v718 = vmul.f32 %v715, %v153
    %v719 = vadd.f32 %v357, %v717
    %v720 = vadd.f32 %v357, %v718
    %v721 = vmul.f32 %v394, %v691
    %v722 = vmul.f32 %v394, %v692
    %v723 = vmul.f32 %v400, %v683
    %v724 = vmul.f32 %v400, %v684
    %v725 = vadd.f32 %v721, %v723
    %v726 = vadd.f32 %v722, %v724
    %v727 = vmul.f32 %v408, %v699
    %v728 = vmul.f32 %v408, %v700
    %v729 = vadd.f32 %v725, %v727
    %v730 = vadd.f32 %v726, %v728
    %v731 = vadd.f32 %v719, %v729
    %v732 = vadd.f32 %v720, %v730
    %v733 = vmul.f32 %v418, %v691
    %v734 = vmul.f32 %v418, %v692
    %v735 = vmul.f32 %v424, %v683
    %v736 = vmul.f32 %v424, %v684
    %v737 = vadd.f32 %v733, %v735
    %v738 = vadd.f32 %v734, %v736
    %v739 = vmul.f32 %v432, %v699
    %v740 = vmul.f32 %v432, %v700
    %v741 = vadd.f32 %v737, %v739
    %v742 = vadd.f32 %v738, %v740
    %743 = vrot.lane.b32.xlu0 %v741, 112
    %v744 = vpop.permute.xlu0 %743
    %745 = vrot.lane.b32.xlu0 %v742, 112
    %v746 = vpop.permute.xlu0 %745
    %v747 = vsel %vm210, %v744, %v746
    %v748 = vsel %vm210, %v746, %v744
    %v749 = vmul.f32 %v747, %v217
    %v750 = vmul.f32 %v748, %v221
    %v751 = vadd.f32 %v731, %v749
    %v752 = vadd.f32 %v732, %v750
    %v753 = vpack.c.bf16 %v547, %v547
    %v754 = vpack.c.bf16 %v548, %v548
    %v756 = vsel %vm459, %v753, 0
    %v759 = vsel %vm459, %v754, 0
    %761 = vmatprep.subr.bf16.mxu0 %v759
    %762 = vmatpush1.bf16.msra.mxu0 %v756
    %763 = vmatprep.subr.bf16.mxu0 0
    %764 = vmatpush1.bf16.msra.mxu0 0
    %765 = vmatprep.subr.bf16.mxu0 0
    %766 = vmatpush1.bf16.msra.mxu0 0
    %767 = vmatprep.subr.bf16.mxu0 0
    %768 = vmatpush1.bf16.msra.mxu0 0
    %769 = vmatprep.subr.bf16.mxu0 0
    %770 = vmatpush1.bf16.msra.mxu0 0
    %771 = vmatprep.subr.bf16.mxu0 0
    %772 = vmatpush1.bf16.msra.mxu0 0
    %773 = vmatprep.subr.bf16.mxu0 0
    %774 = vmatpush1.bf16.msra.mxu0 0
    %775 = vmatprep.subr.bf16.mxu0 0
    %776 = vmatpush1.bf16.msra.mxu0 0
    %777 = vmatprep.subr.bf16.mxu0 0
    %778 = vmatpush1.bf16.msra.mxu0 0
    %779 = vmatprep.subr.bf16.mxu0 0
    %780 = vmatpush1.bf16.msra.mxu0 0
    %781 = vmatprep.subr.bf16.mxu0 0
    %782 = vmatpush1.bf16.msra.mxu0 0
    %783 = vmatprep.subr.bf16.mxu0 0
    %784 = vmatpush1.bf16.msra.mxu0 0
    %785 = vmatprep.subr.bf16.mxu0 0
    %786 = vmatpush1.bf16.msra.mxu0 0
    %787 = vmatprep.subr.bf16.mxu0 0
    %788 = vmatpush1.bf16.msra.mxu0 0
    %789 = vmatprep.subr.bf16.mxu0 0
    %790 = vmatpush1.bf16.msra.mxu0 0
    %791 = vmatprep.subr.bf16.mxu0 0
    %792 = vmatpush1.bf16.msra.mxu0 0
    %793 = vmatprep.mubr.bf16.mxu0 0
    %794 = vmatmul.mubr.bf16.gmra.mrb[0].mxu0 %v457
    %v795 = vpop.f32.mrb[0].mxu0
    %v796 = vadd.f32 %v453, %v795
    %v797 = vpop.f32.mrb[0].mxu0
    %v798 = vadd.f32 %v453, %v797
    %v799 = vpop.f32.mrb[0].mxu0
    %v800 = vpop.f32.mrb[0].mxu0
    %801 = vdwg.mxu0
    %v802 = vxor.u32 %v796, 2147483648
    %v803 = vxor.u32 %v798, 2147483648
    %v804 = vmul.f32 %v802, 1.442695
    %v805 = vpow.pop %v804
    %v806 = vmul.f32 %v803, 1.442695
    %v807 = vpow.pop %v806
    %v808 = vadd.f32 %v805, 1.0
    %v809 = vadd.f32 %v807, 1.0
    %v810 = vrcp.pop %v808
    %v811 = vmul.f32 1.0, %v810
    %v812 = vrcp.pop %v809
    %v813 = vmul.f32 1.0, %v812
    %v816 = vrot.slane %v615, 4
    %v817 = vrot.slane %v616, 4
    %v822 = vrot.slane %v683, 6
    %v823 = vrot.slane %v684, 6
    %v828 = vrot.slane %v751, 2
    %v829 = vrot.slane %v752, 2
    %v832 = vsel %vm459, %v816, %v822
    %v833 = vsel %vm459, %v817, %v823
    %v834 = vsel %vm539, %v832, %v828
    %v835 = vsel %vm539, %v833, %v829
    %v836 = vmul.f32 %v811, %v834
    %v837 = vmul.f32 %v813, %v835
    %s838 = scalar_lea.vmem [#allocation5], 16
    %839 = vst [vmem:[%s838] sm:$0xff] %v836
    %840 = vst [vmem:[%s838 + $0x8] sm:$0xff] %v837
    // Predicated region
    $region46: #{tpu_custom_call.1} parent=1 // pred_check
      _
    $region47: #{tpu_custom_call.1} parent=1 // pred_check_branch
      %842 = sbr.rel (0) target = $region49
    $region48: #{tpu_custom_call.1} parent=1 // pred_region
      %s844 = ssub.s32 512, 512
      %845 = vsyncadd [#allocation4], %s844
      %s846 = sshll.u32 [#allocation5], 4
      %s847 = int_to_ptr.vmem [resolvable:$true] %s846
      %852 = dma.vmem_to_hbm [thread:$0]  %s847, 512, %s10, [#allocation4], 256, 256, 16
    $region49: #{tpu_custom_call.1} parent=1 // pred_fallthru
      _
    // Predicated region
    $region50: #{tpu_custom_call.1} parent=1 // pred_check
      _
    $region51: #{tpu_custom_call.1} parent=1 // pred_check_branch
      %854 = sbr.rel (0) target = $region53
    $region52: #{tpu_custom_call.1} parent=1 // pred_region
      %855 = dma.done [#allocation4], 512
    $region53: #{tpu_custom_call.1} parent=1 // pred_fallthru
      _
    %856 = vsyncpa [#allocation3], 1
    %857 = vsyncpa [#allocation4], 1

</llo_original>
